<compile_context>
chip_gen: v7x
topology: tpu7x:2x2x1
jax: 0.10.0
libtpu: 0.0.40
codegen_flags: <defaults>
</compile_context>

<pallas_src>
import jax
import jax.numpy as jnp
import numpy as np
from jax import lax
from jax.experimental import pallas as pl
from jax.experimental.pallas import tpu as pltpu

EPS = 1e-12
RESCALE_INTERVEL_MAX = 1 - 0.0001
RESCALE_INTERVEL_MIN = 0.0001
KSIZE = 5
PAD = KSIZE // 2


# ----------------------------------------------------------------------------
# Fused kernel: one grid step per batch block.
#   conv(F->1, k=5) -> sigmoid -> monotonic_score_norm -> FrameAlignment
#   also emits per-frame mean of (exp(x) or x) for the guide-loss epilogue.
# ----------------------------------------------------------------------------
def _nafa_kernel(flag_ref, x_ref, wk_ref, b_ref, tmpl_ref, slab_ref, feat_ref):
    Bb, T, F = x_ref.shape

    x = x_ref[...].astype(jnp.float32)                        # [Bb, T, F]
    wk = wk_ref[...]                                          # [K, F]

    # --- DilatedConv: Conv1d(F->1, k=5, same) via in-register sublane rolls ---
    # No padded VMEM scratch: each tap = XLU sublane rotate + edge mask,
    # accumulated in registers; one lane reduction over F at the end.
    t_idx = lax.broadcasted_iota(jnp.int32, (Bb, T, F), 1)    # hoisted once
    acc = jnp.zeros((Bb, T, F), jnp.float32)
    for k in range(KSIZE):
        off = k - PAD                                         # time offset -2..+2
        shifted = x if off == 0 else pltpu.roll(x, shift=(-off) % T, axis=1)
        valid = jnp.logical_and(t_idx + off >= 0, t_idx + off < T)
        acc = acc + jnp.where(valid, shifted, 0.0) * wk[k]    # wk[k]: [F]
    conv = jnp.sum(acc, axis=-1) + b_ref[...]                 # [Bb, T] (+ bias)
    score = jax.nn.sigmoid(conv)                              # [Bb, T] lane-dense

    # --- monotonic_score_norm (per-batch lane reductions) ---------------------
    total = jnp.float32(T)
    ssum = jnp.sum(score, axis=-1, keepdims=True)             # [Bb, 1]
    score = score / ssum * total
    maxv = jnp.max(score, axis=-1, keepdims=True)
    score = jnp.where(maxv >= 1.0, score / maxv, score)
    dist = total - jnp.sum(score, axis=-1, keepdims=True)
    in_band = jnp.logical_and(score < RESCALE_INTERVEL_MAX,
                              score > RESCALE_INTERVEL_MIN)
    interv = jnp.where(in_band, 1.0 - score, 0.0)
    alpha = jnp.minimum(dist / jnp.sum(interv, axis=-1, keepdims=True), 1.0)
    score = jnp.where(jnp.logical_and(dist >= 1.0, in_band),
                      score + interv * alpha, score)

    # --- FrameAlignment: softmax(-|score_i - tmpl_j|) @ exp(x) -----------------
    # Shift by the row MIN of dmat so the largest exponent is exactly 0
    # (robust for large T / template magnitudes; identical to the reference's
    # shift-invariant softmax).
    dmat = jnp.abs(score[:, :, None] - tmpl_ref[...])         # [Bb, T, T]
    e = jnp.exp(-(dmat - jnp.min(dmat, axis=-1, keepdims=True)))
    path = e / jnp.sum(e, axis=-1, keepdims=True)             # [Bb, T, T]

    ex = jnp.exp(x)                                           # [Bb, T, F]
    aligned = jnp.einsum('bij,bjf->bif', path, ex,
                         preferred_element_type=jnp.float32)  # [Bb, T, F]
    feat_ref[...] = jnp.log(aligned + EPS)

    # --- guide-loss row-mean: select AFTER the F-reduction ([Bb,T] not [Bb,T,F])
    use_exp = flag_ref[0] == 1
    rowmean = jnp.where(use_exp, jnp.mean(ex, axis=-1), jnp.mean(x, axis=-1))

    # merged lane-dense output slab: [Bb, 2T] = [score | rowmean] -> one DMA
    slab_ref[...] = jnp.concatenate([score, rowmean], axis=-1)


# ----------------------------------------------------------------------------
# Batch-block planning: largest multiple-of-8 block under a VMEM budget,
# with the grid guaranteed to have >= 2 steps (v7x dual-TensorCore).
# ----------------------------------------------------------------------------
def _plan_batch(B, T, F):
    # Rough per-sample f32 live set: x/exp/aligned/iota ([T,F]) + ~3 [T,T]
    # softmax temporaries + double-buffered I/O blocks + the [2T] slab.
    per_sample = 4 * (3 * T * T + 8 * T * F + 8 * T)
    budget = 20 << 20                    # headroom under the 32 MiB scoped cap
    bb = (budget // max(per_sample, 1)) // 8 * 8
    bb = int(max(8, min(256, bb)))
    # cap so that the grid has at least 2 steps (both v7x TensorCores get work)
    half = -(-B // 2)
    bb = min(bb, max(8, -(-half // 8) * 8))
    b_pad = max(2, -(-B // bb)) * bb
    return bb, b_pad


# ----------------------------------------------------------------------------
# Wrapper (jitted so the O(B*T) guide-loss epilogue / slicing fuse in XLA).
# ----------------------------------------------------------------------------
@jax.jit
def nafa_forward(x, params):
    B, T, F = x.shape
    Bb, B_pad = _plan_batch(B, T, F)

    wk = jnp.transpose(params["conv_w"])        # [K, F]
    b = params["conv_b"]                        # [1, 1]
    tmpl = params["template"].reshape(1, T)     # learned_template [1,T,1] -> [1,T]

    # torch.min(mel) < 0  ->  use exp(x) inside guide_loss (from unpadded x)
    use_exp = (jnp.min(x) < 0).astype(jnp.int32).reshape(1)

    xp = x if B_pad == B else jnp.pad(x, ((0, B_pad - B), (0, 0), (0, 0)))

    grid_spec = pltpu.PrefetchScalarGridSpec(
        num_scalar_prefetch=1,
        grid=(B_pad // Bb,),
        in_specs=[
            pl.BlockSpec((Bb, T, F), lambda bi, flag: (bi, 0, 0)),
            pl.BlockSpec((KSIZE, F), lambda bi, flag: (0, 0)),
            pl.BlockSpec((1, 1), lambda bi, flag: (0, 0)),
            pl.BlockSpec((1, T), lambda bi, flag: (0, 0)),
        ],
        out_specs=[
            pl.BlockSpec((Bb, 2 * T), lambda bi, flag: (bi, 0)),
            pl.BlockSpec((Bb, T, F), lambda bi, flag: (bi, 0, 0)),
        ],
    )
    slab, feat = pl.pallas_call(
        _nafa_kernel,
        out_shape=(
            jax.ShapeDtypeStruct((B_pad, 2 * T), jnp.float32),
            jax.ShapeDtypeStruct((B_pad, T, F), jnp.float32),
        ),
        grid_spec=grid_spec,
        compiler_params=pltpu.CompilerParams(
            dimension_semantics=("parallel",),
            vmem_limit_bytes=32 << 20),
    )(use_exp, xp, wk, b, tmpl)

    # split the merged slab / drop batch padding (free wrapper slices)
    score2d = slab[:B, :T]
    rowmean = slab[:B, T:]
    feat = feat[:B]

    # --- guide loss: tiny O(B*T) epilogue, fused by XLA (no 2nd kernel) -------
    mask = rowmean < (jnp.min(rowmean) + 1e-6)
    cnt = jnp.sum(mask.astype(jnp.float32), axis=1)           # [B]
    ssum = jnp.sum(jnp.where(mask, score2d, 0.0), axis=1)     # [B]
    g = ssum / jnp.maximum(cnt, 1.0)                          # masked mean
    guide = jnp.sum(jnp.where(jnp.logical_and(cnt > 0, g > 0.5), g / B, 0.0))
    guide = guide.reshape(1)

    score = score2d[:, :, None]                               # module API: [B, T, 1]
    return {"x": x, "score": score, "features": feat,
            "guide_loss": guide, "total_loss": guide}


# ----------------------------------------------------------------------------
# Pure-JAX reference (mirrors the PyTorch semantics, branchless)
# ----------------------------------------------------------------------------
def nafa_reference(x, params):
    B, T, F = x.shape
    w = params["conv_w"]                         # [F, K]
    b = params["conv_b"][0, 0]
    tmpl = params["template"].reshape(1, T)
    total = float(T)

    xpad = jnp.pad(x, ((0, 0), (PAD, PAD), (0, 0)))
    conv = jnp.zeros((B, T), jnp.float32) + b
    for k in range(KSIZE):
        conv = conv + jnp.einsum('btf,f->bt', xpad[:, k:k + T, :], w[:, k])
    score = jax.nn.sigmoid(conv)[..., None]

    s = jnp.sum(score, axis=(1, 2), keepdims=True)
    score = score / s * total
    maxv = jnp.max(score, axis=(1, 2), keepdims=True)
    score = jnp.where(maxv >= 1.0, score / maxv, score)
    dist = total - jnp.sum(score, axis=(1, 2), keepdims=True)
    ax = jnp.logical_and(score < RESCALE_INTERVEL_MAX, score > RESCALE_INTERVEL_MIN)
    interv = jnp.where(ax, 1.0 - score, 0.0)
    alpha = jnp.minimum(dist / jnp.sum(interv, axis=(1, 2), keepdims=True), 1.0)
    score = jnp.where(jnp.logical_and(dist >= 1.0, ax), score + interv * alpha, score)

    D = jnp.abs(score - tmpl[:, None, :])
    logits = -D - jnp.max(D, axis=-1, keepdims=True)
    path = jax.nn.softmax(logits, axis=-1)
    ex = jnp.exp(x)
    feat = jnp.log(jnp.einsum('bij,bjf->bif', path, ex) + EPS)

    xe = jnp.where(jnp.min(x) < 0, ex, x)
    rm = jnp.mean(xe, axis=-1, keepdims=True)
    mask = rm < (jnp.min(rm) + 1e-6)
    cnt = jnp.sum(mask.astype(jnp.float32), axis=(1, 2))
    ssum = jnp.sum(jnp.where(mask, score, 0.0), axis=(1, 2))
    g = ssum / jnp.maximum(cnt, 1.0)
    gl = jnp.sum(jnp.where(jnp.logical_and(cnt > 0, g > 0.5), g / B, 0.0))
    return score, feat, jnp.array([gl])


def init_params(key, T, F):
    k1, k2 = jax.random.split(key, 2)
    conv_w = jax.random.normal(k1, (F, KSIZE), jnp.float32) / np.sqrt(F * KSIZE)
    conv_b = jnp.full((1, 1), 0.05, jnp.float32)
    template = jax.random.normal(k2, (1, T, 1), jnp.float32)   # nn.Parameter(randn(1,T,1))
    return dict(conv_w=conv_w, conv_b=conv_b, template=template)


if __name__ == "__main__":
    B, T, F = 2, 16, 8        # in_t_dim = 16, in_f_dim = 8
    key = jax.random.PRNGKey(0)
    kx, kp = jax.random.split(key)
    x = jax.random.normal(kx, (B, T, F), jnp.float32)
    params = init_params(kp, T, F)

    out = nafa_forward(x, params)
    jax.block_until_ready(out)

    ref_score, ref_feat, ref_guide = nafa_reference(x, params)
    np.testing.assert_allclose(np.asarray(out["score"]), np.asarray(ref_score),
                               rtol=1e-4, atol=1e-4)
    np.testing.assert_allclose(np.asarray(out["features"]), np.asarray(ref_feat),
                               rtol=1e-4, atol=1e-4)
    np.testing.assert_allclose(np.asarray(out["guide_loss"]), np.asarray(ref_guide),
                               rtol=1e-4, atol=1e-4)
    print("KERNEL_OK")
</pallas_src>

<mosaic_0001>
module attributes {stable_mosaic.version = 11 : i64} {
  func.func @_nafa_kernel(%arg0: i32, %arg1: memref<1xi32, #tpu.memory_space<smem>>, %arg2: memref<8x16x8xf32, #tpu.memory_space<vmem>>, %arg3: memref<5x8xf32, #tpu.memory_space<vmem>>, %arg4: memref<1x1xf32, #tpu.memory_space<vmem>>, %arg5: memref<1x16xf32, #tpu.memory_space<vmem>>, %arg6: memref<8x32xf32, #tpu.memory_space<vmem>>, %arg7: memref<8x16x8xf32, #tpu.memory_space<vmem>>) attributes {dimension_semantics = [#tpu.dimension_semantics<parallel>], iteration_bounds = array<i64: 2>, scalar_prefetch = 1 : i64, scratch_operands = 0 : i64, tpu.core_type = #tpu.core_type<tc>, window_params = [{transform_indices = @transform_0, window_bounds = array<i64: 8, 16, 8>}, {pipeline_mode = #tpu.pipeline_mode<synchronous>, transform_indices = @transform_1, window_bounds = array<i64: 5, 8>}, {pipeline_mode = #tpu.pipeline_mode<synchronous>, transform_indices = @transform_2, window_bounds = array<i64: 1, 1>}, {pipeline_mode = #tpu.pipeline_mode<synchronous>, transform_indices = @transform_3, window_bounds = array<i64: 1, 16>}, {transform_indices = @transform_4, window_bounds = array<i64: 8, 32>}, {transform_indices = @transform_5, window_bounds = array<i64: 8, 16, 8>}]} {
    %c0 = arith.constant 0 : index
    %c0_0 = arith.constant 0 : index
    %c0_1 = arith.constant 0 : index
    %0 = vector.load %arg2[%c0, %c0_0, %c0_1] : memref<8x16x8xf32, #tpu.memory_space<vmem>>, vector<8x16x8xf32>
    %c0_2 = arith.constant 0 : index
    %c0_3 = arith.constant 0 : index
    %1 = vector.load %arg3[%c0_2, %c0_3] : memref<5x8xf32, #tpu.memory_space<vmem>>, vector<5x8xf32>
    %2 = tpu.iota {dimensions = array<i32: 1>} : vector<8x16x8xi32>
    %cst = arith.constant 0.000000e+00 : f32
    %3 = vector.broadcast %cst : f32 to vector<8x16x8xf32>
    %c2_i32 = arith.constant 2 : i32
    %4 = tpu.dynamic_rotate %0 by %c2_i32 dim 1 : vector<8x16x8xf32>, i32 -> vector<8x16x8xf32>
    %c-2_i32 = arith.constant -2 : i32
    %5 = vector.broadcast %c-2_i32 : i32 to vector<8x16x8xi32>
    %6 = arith.addi %2, %5 : vector<8x16x8xi32>
    %c0_i32 = arith.constant 0 : i32
    %7 = vector.broadcast %c0_i32 : i32 to vector<8x16x8xi32>
    %8 = arith.cmpi sge, %6, %7 : vector<8x16x8xi32>
    %c-2_i32_4 = arith.constant -2 : i32
    %9 = vector.broadcast %c-2_i32_4 : i32 to vector<8x16x8xi32>
    %10 = arith.addi %2, %9 : vector<8x16x8xi32>
    %c16_i32 = arith.constant 16 : i32
    %11 = vector.broadcast %c16_i32 : i32 to vector<8x16x8xi32>
    %12 = arith.cmpi slt, %10, %11 : vector<8x16x8xi32>
    %13 = arith.andi %8, %12 : vector<8x16x8xi1>
    %cst_5 = arith.constant 0.000000e+00 : f32
    %14 = vector.broadcast %cst_5 : f32 to vector<8x16x8xf32>
    %15 = arith.select %13, %4, %14 : vector<8x16x8xi1>, vector<8x16x8xf32>
    %16 = vector.extract_strided_slice %1 {offsets = [0, 0], sizes = [1, 8], strides = [1, 1]} : vector<5x8xf32> to vector<1x8xf32>
    %17 = vector.shape_cast %16 : vector<1x8xf32> to vector<8xf32>
    %18 = vector.shape_cast %17 : vector<8xf32> to vector<1x1x8xf32>
    %19 = vector.broadcast %18 : vector<1x1x8xf32> to vector<8x16x8xf32>
    %20 = arith.mulf %15, %19 : vector<8x16x8xf32>
    %21 = arith.addf %3, %20 : vector<8x16x8xf32>
    %c1_i32 = arith.constant 1 : i32
    %22 = tpu.dynamic_rotate %0 by %c1_i32 dim 1 : vector<8x16x8xf32>, i32 -> vector<8x16x8xf32>
    %c-1_i32 = arith.constant -1 : i32
    %23 = vector.broadcast %c-1_i32 : i32 to vector<8x16x8xi32>
    %24 = arith.addi %2, %23 : vector<8x16x8xi32>
    %c0_i32_6 = arith.constant 0 : i32
    %25 = vector.broadcast %c0_i32_6 : i32 to vector<8x16x8xi32>
    %26 = arith.cmpi sge, %24, %25 : vector<8x16x8xi32>
    %c-1_i32_7 = arith.constant -1 : i32
    %27 = vector.broadcast %c-1_i32_7 : i32 to vector<8x16x8xi32>
    %28 = arith.addi %2, %27 : vector<8x16x8xi32>
    %c16_i32_8 = arith.constant 16 : i32
    %29 = vector.broadcast %c16_i32_8 : i32 to vector<8x16x8xi32>
    %30 = arith.cmpi slt, %28, %29 : vector<8x16x8xi32>
    %31 = arith.andi %26, %30 : vector<8x16x8xi1>
    %cst_9 = arith.constant 0.000000e+00 : f32
    %32 = vector.broadcast %cst_9 : f32 to vector<8x16x8xf32>
    %33 = arith.select %31, %22, %32 : vector<8x16x8xi1>, vector<8x16x8xf32>
    %34 = vector.extract_strided_slice %1 {offsets = [1, 0], sizes = [1, 8], strides = [1, 1]} : vector<5x8xf32> to vector<1x8xf32>
    %35 = vector.shape_cast %34 : vector<1x8xf32> to vector<8xf32>
    %36 = vector.shape_cast %35 : vector<8xf32> to vector<1x1x8xf32>
    %37 = vector.broadcast %36 : vector<1x1x8xf32> to vector<8x16x8xf32>
    %38 = arith.mulf %33, %37 : vector<8x16x8xf32>
    %39 = arith.addf %21, %38 : vector<8x16x8xf32>
    %c0_i32_10 = arith.constant 0 : i32
    %40 = vector.broadcast %c0_i32_10 : i32 to vector<8x16x8xi32>
    %41 = arith.addi %2, %40 : vector<8x16x8xi32>
    %c0_i32_11 = arith.constant 0 : i32
    %42 = vector.broadcast %c0_i32_11 : i32 to vector<8x16x8xi32>
    %43 = arith.cmpi sge, %41, %42 : vector<8x16x8xi32>
    %c0_i32_12 = arith.constant 0 : i32
    %44 = vector.broadcast %c0_i32_12 : i32 to vector<8x16x8xi32>
    %45 = arith.addi %2, %44 : vector<8x16x8xi32>
    %c16_i32_13 = arith.constant 16 : i32
    %46 = vector.broadcast %c16_i32_13 : i32 to vector<8x16x8xi32>
    %47 = arith.cmpi slt, %45, %46 : vector<8x16x8xi32>
    %48 = arith.andi %43, %47 : vector<8x16x8xi1>
    %cst_14 = arith.constant 0.000000e+00 : f32
    %49 = vector.broadcast %cst_14 : f32 to vector<8x16x8xf32>
    %50 = arith.select %48, %0, %49 : vector<8x16x8xi1>, vector<8x16x8xf32>
    %51 = vector.extract_strided_slice %1 {offsets = [2, 0], sizes = [1, 8], strides = [1, 1]} : vector<5x8xf32> to vector<1x8xf32>
    %52 = vector.shape_cast %51 : vector<1x8xf32> to vector<8xf32>
    %53 = vector.shape_cast %52 : vector<8xf32> to vector<1x1x8xf32>
    %54 = vector.broadcast %53 : vector<1x1x8xf32> to vector<8x16x8xf32>
    %55 = arith.mulf %50, %54 : vector<8x16x8xf32>
    %56 = arith.addf %39, %55 : vector<8x16x8xf32>
    %c15_i32 = arith.constant 15 : i32
    %57 = tpu.dynamic_rotate %0 by %c15_i32 dim 1 : vector<8x16x8xf32>, i32 -> vector<8x16x8xf32>
    %c1_i32_15 = arith.constant 1 : i32
    %58 = vector.broadcast %c1_i32_15 : i32 to vector<8x16x8xi32>
    %59 = arith.addi %2, %58 : vector<8x16x8xi32>
    %c0_i32_16 = arith.constant 0 : i32
    %60 = vector.broadcast %c0_i32_16 : i32 to vector<8x16x8xi32>
    %61 = arith.cmpi sge, %59, %60 : vector<8x16x8xi32>
    %c1_i32_17 = arith.constant 1 : i32
    %62 = vector.broadcast %c1_i32_17 : i32 to vector<8x16x8xi32>
    %63 = arith.addi %2, %62 : vector<8x16x8xi32>
    %c16_i32_18 = arith.constant 16 : i32
    %64 = vector.broadcast %c16_i32_18 : i32 to vector<8x16x8xi32>
    %65 = arith.cmpi slt, %63, %64 : vector<8x16x8xi32>
    %66 = arith.andi %61, %65 : vector<8x16x8xi1>
    %cst_19 = arith.constant 0.000000e+00 : f32
    %67 = vector.broadcast %cst_19 : f32 to vector<8x16x8xf32>
    %68 = arith.select %66, %57, %67 : vector<8x16x8xi1>, vector<8x16x8xf32>
    %69 = vector.extract_strided_slice %1 {offsets = [3, 0], sizes = [1, 8], strides = [1, 1]} : vector<5x8xf32> to vector<1x8xf32>
    %70 = vector.shape_cast %69 : vector<1x8xf32> to vector<8xf32>
    %71 = vector.shape_cast %70 : vector<8xf32> to vector<1x1x8xf32>
    %72 = vector.broadcast %71 : vector<1x1x8xf32> to vector<8x16x8xf32>
    %73 = arith.mulf %68, %72 : vector<8x16x8xf32>
    %74 = arith.addf %56, %73 : vector<8x16x8xf32>
    %c14_i32 = arith.constant 14 : i32
    %75 = tpu.dynamic_rotate %0 by %c14_i32 dim 1 : vector<8x16x8xf32>, i32 -> vector<8x16x8xf32>
    %c2_i32_20 = arith.constant 2 : i32
    %76 = vector.broadcast %c2_i32_20 : i32 to vector<8x16x8xi32>
    %77 = arith.addi %2, %76 : vector<8x16x8xi32>
    %c0_i32_21 = arith.constant 0 : i32
    %78 = vector.broadcast %c0_i32_21 : i32 to vector<8x16x8xi32>
    %79 = arith.cmpi sge, %77, %78 : vector<8x16x8xi32>
    %c2_i32_22 = arith.constant 2 : i32
    %80 = vector.broadcast %c2_i32_22 : i32 to vector<8x16x8xi32>
    %81 = arith.addi %2, %80 : vector<8x16x8xi32>
    %c16_i32_23 = arith.constant 16 : i32
    %82 = vector.broadcast %c16_i32_23 : i32 to vector<8x16x8xi32>
    %83 = arith.cmpi slt, %81, %82 : vector<8x16x8xi32>
    %84 = arith.andi %79, %83 : vector<8x16x8xi1>
    %cst_24 = arith.constant 0.000000e+00 : f32
    %85 = vector.broadcast %cst_24 : f32 to vector<8x16x8xf32>
    %86 = arith.select %84, %75, %85 : vector<8x16x8xi1>, vector<8x16x8xf32>
    %87 = vector.extract_strided_slice %1 {offsets = [4, 0], sizes = [1, 8], strides = [1, 1]} : vector<5x8xf32> to vector<1x8xf32>
    %88 = vector.shape_cast %87 : vector<1x8xf32> to vector<8xf32>
    %89 = vector.shape_cast %88 : vector<8xf32> to vector<1x1x8xf32>
    %90 = vector.broadcast %89 : vector<1x1x8xf32> to vector<8x16x8xf32>
    %91 = arith.mulf %86, %90 : vector<8x16x8xf32>
    %92 = arith.addf %74, %91 : vector<8x16x8xf32>
    %cst_25 = arith.constant dense<0.000000e+00> : vector<8x16xf32>
    %93 = vector.multi_reduction <add>, %92, %cst_25 [2] : vector<8x16x8xf32> to vector<8x16xf32>
    %c0_26 = arith.constant 0 : index
    %c0_27 = arith.constant 0 : index
    %94 = vector.load %arg4[%c0_26, %c0_27] : memref<1x1xf32, #tpu.memory_space<vmem>>, vector<1x1xf32>
    %95 = vector.broadcast %94 : vector<1x1xf32> to vector<8x16xf32>
    %96 = arith.addf %93, %95 : vector<8x16xf32>
    %97 = arith.negf %96 : vector<8x16xf32>
    %98 = math.exp %97 : vector<8x16xf32>
    %cst_28 = arith.constant 1.000000e+00 : f32
    %99 = vector.broadcast %cst_28 : f32 to vector<8x16xf32>
    %100 = arith.addf %99, %98 : vector<8x16xf32>
    %101 = arith.divf %99, %100 : vector<8x16xf32>
    %cst_29 = arith.constant dense<0.000000e+00> : vector<8xf32>
    %102 = vector.multi_reduction <add>, %101, %cst_29 [1] : vector<8x16xf32> to vector<8xf32>
    %103 = vector.shape_cast %102 : vector<8xf32> to vector<8x1xf32>
    %104 = vector.broadcast %103 : vector<8x1xf32> to vector<8x16xf32>
    %105 = arith.divf %101, %104 : vector<8x16xf32>
    %cst_30 = arith.constant 1.600000e+01 : f32
    %106 = vector.broadcast %cst_30 : f32 to vector<8x16xf32>
    %107 = arith.mulf %105, %106 : vector<8x16xf32>
    %cst_31 = arith.constant dense<0xFF800000> : vector<8xf32>
    %108 = vector.multi_reduction <maximumf>, %107, %cst_31 [1] : vector<8x16xf32> to vector<8xf32>
    %109 = vector.shape_cast %108 : vector<8xf32> to vector<8x1xf32>
    %cst_32 = arith.constant 1.000000e+00 : f32
    %110 = vector.broadcast %cst_32 : f32 to vector<8x1xf32>
    %111 = arith.cmpf oge, %109, %110 : vector<8x1xf32>
    %112 = vector.broadcast %109 : vector<8x1xf32> to vector<8x16xf32>
    %113 = arith.divf %107, %112 : vector<8x16xf32>
    %114 = vector.shape_cast %111 : vector<8x1xi1> to vector<8x1xi1>
    %115 = vector.broadcast %114 : vector<8x1xi1> to vector<8x16xi1>
    %116 = arith.select %115, %113, %107 : vector<8x16xi1>, vector<8x16xf32>
    %cst_33 = arith.constant dense<0.000000e+00> : vector<8xf32>
    %117 = vector.multi_reduction <add>, %116, %cst_33 [1] : vector<8x16xf32> to vector<8xf32>
    %118 = vector.shape_cast %117 : vector<8xf32> to vector<8x1xf32>
    %cst_34 = arith.constant 1.600000e+01 : f32
    %119 = vector.broadcast %cst_34 : f32 to vector<8x1xf32>
    %120 = arith.subf %119, %118 : vector<8x1xf32>
    %cst_35 = arith.constant 0.999899983 : f32
    %121 = vector.broadcast %cst_35 : f32 to vector<8x16xf32>
    %122 = arith.cmpf olt, %116, %121 : vector<8x16xf32>
    %cst_36 = arith.constant 9.99999974E-5 : f32
    %123 = vector.broadcast %cst_36 : f32 to vector<8x16xf32>
    %124 = arith.cmpf ogt, %116, %123 : vector<8x16xf32>
    %125 = arith.andi %122, %124 : vector<8x16xi1>
    %cst_37 = arith.constant 1.000000e+00 : f32
    %126 = vector.broadcast %cst_37 : f32 to vector<8x16xf32>
    %127 = arith.subf %126, %116 : vector<8x16xf32>
    %cst_38 = arith.constant 0.000000e+00 : f32
    %128 = vector.broadcast %cst_38 : f32 to vector<8x16xf32>
    %129 = arith.select %125, %127, %128 : vector<8x16xi1>, vector<8x16xf32>
    %cst_39 = arith.constant dense<0.000000e+00> : vector<8xf32>
    %130 = vector.multi_reduction <add>, %129, %cst_39 [1] : vector<8x16xf32> to vector<8xf32>
    %131 = vector.shape_cast %130 : vector<8xf32> to vector<8x1xf32>
    %132 = arith.divf %120, %131 : vector<8x1xf32>
    %cst_40 = arith.constant 1.000000e+00 : f32
    %133 = vector.broadcast %cst_40 : f32 to vector<8x1xf32>
    %134 = arith.minimumf %132, %133 : vector<8x1xf32>
    %cst_41 = arith.constant 1.000000e+00 : f32
    %135 = vector.broadcast %cst_41 : f32 to vector<8x1xf32>
    %136 = arith.cmpf oge, %120, %135 : vector<8x1xf32>
    %137 = vector.broadcast %136 : vector<8x1xi1> to vector<8x16xi1>
    %138 = arith.andi %137, %125 : vector<8x16xi1>
    %139 = vector.broadcast %134 : vector<8x1xf32> to vector<8x16xf32>
    %140 = arith.mulf %129, %139 : vector<8x16xf32>
    %141 = arith.addf %116, %140 : vector<8x16xf32>
    %142 = arith.select %138, %141, %116 : vector<8x16xi1>, vector<8x16xf32>
    %143 = vector.shape_cast %142 : vector<8x16xf32> to vector<8x16x1xf32>
    %c0_42 = arith.constant 0 : index
    %c0_43 = arith.constant 0 : index
    %144 = vector.load %arg5[%c0_42, %c0_43] : memref<1x16xf32, #tpu.memory_space<vmem>>, vector<1x16xf32>
    %145 = vector.shape_cast %144 : vector<1x16xf32> to vector<1x1x16xf32>
    %146 = vector.broadcast %143 : vector<8x16x1xf32> to vector<8x16x16xf32>
    %147 = vector.broadcast %145 : vector<1x1x16xf32> to vector<8x16x16xf32>
    %148 = arith.subf %146, %147 : vector<8x16x16xf32>
    %149 = math.absf %148 : vector<8x16x16xf32>
    %cst_44 = arith.constant dense<0x7F800000> : vector<8x16xf32>
    %150 = vector.multi_reduction <minimumf>, %149, %cst_44 [2] : vector<8x16x16xf32> to vector<8x16xf32>
    %151 = vector.shape_cast %150 : vector<8x16xf32> to vector<8x16x1xf32>
    %152 = vector.broadcast %151 : vector<8x16x1xf32> to vector<8x16x16xf32>
    %153 = arith.subf %149, %152 : vector<8x16x16xf32>
    %cst_45 = arith.constant 0.000000e+00 : f32
    %154 = vector.broadcast %cst_45 : f32 to vector<8x16x16xf32>
    %155 = arith.subf %154, %153 : vector<8x16x16xf32>
    %156 = math.exp %155 : vector<8x16x16xf32>
    %cst_46 = arith.constant dense<0.000000e+00> : vector<8x16xf32>
    %157 = vector.multi_reduction <add>, %156, %cst_46 [2] : vector<8x16x16xf32> to vector<8x16xf32>
    %158 = vector.shape_cast %157 : vector<8x16xf32> to vector<8x16x1xf32>
    %159 = vector.broadcast %158 : vector<8x16x1xf32> to vector<8x16x16xf32>
    %160 = arith.divf %156, %159 : vector<8x16x16xf32>
    %161 = math.exp %0 : vector<8x16x8xf32>
    "tpu.trace_start"() <{level = 10 : i32, message = "bij,bjf->bif"}> : () -> ()
    %cst_47 = arith.constant dense<0.000000e+00> : vector<8x16x8xf32>
    %162 = tpu.matmul %160, %161, %cst_47 {dimension_numbers = #tpu.dot_dimension_numbers<[2], [1], [1], [2], [0, 0, 0, 1, 1, 2], [0], [0]>} : vector<8x16x16xf32>, vector<8x16x8xf32>, vector<8x16x8xf32> -> vector<8x16x8xf32>
    "tpu.trace_stop"() : () -> ()
    %cst_48 = arith.constant 9.99999996E-13 : f32
    %163 = vector.broadcast %cst_48 : f32 to vector<8x16x8xf32>
    %164 = arith.addf %162, %163 : vector<8x16x8xf32>
    %165 = math.log %164 : vector<8x16x8xf32>
    %c0_49 = arith.constant 0 : index
    %c0_50 = arith.constant 0 : index
    %c0_51 = arith.constant 0 : index
    %166 = vector.load %arg7[%c0_49, %c0_50, %c0_51] : memref<8x16x8xf32, #tpu.memory_space<vmem>>, vector<8x16x8xf32>
    tpu.vector_store %arg7[%c0_49, %c0_50, %c0_51], %165 {strides = array<i32>} : memref<8x16x8xf32, #tpu.memory_space<vmem>>, vector<8x16x8xf32>,
    %c0_52 = arith.constant 0 : index
    %167 = memref.load %arg1[%c0_52] : memref<1xi32, #tpu.memory_space<smem>>
    %c1_i32_53 = arith.constant 1 : i32
    %168 = arith.cmpi eq, %167, %c1_i32_53 : i32
    %cst_54 = arith.constant dense<0.000000e+00> : vector<8x16xf32>
    %169 = vector.multi_reduction <add>, %161, %cst_54 [2] : vector<8x16x8xf32> to vector<8x16xf32>
    %cst_55 = arith.constant 8.000000e+00 : f32
    %170 = vector.broadcast %cst_55 : f32 to vector<8x16xf32>
    %171 = arith.divf %169, %170 : vector<8x16xf32>
    %cst_56 = arith.constant dense<0.000000e+00> : vector<8x16xf32>
    %172 = vector.multi_reduction <add>, %0, %cst_56 [2] : vector<8x16x8xf32> to vector<8x16xf32>
    %cst_57 = arith.constant 8.000000e+00 : f32
    %173 = vector.broadcast %cst_57 : f32 to vector<8x16xf32>
    %174 = arith.divf %172, %173 : vector<8x16xf32>
    %175 = arith.select %168, %171, %174 : vector<8x16xf32>
    %176 = tpu.concatenate %142, %175 in 1 : vector<8x16xf32>, vector<8x16xf32> -> vector<8x32xf32>
    %c0_58 = arith.constant 0 : index
    %c0_59 = arith.constant 0 : index
    %177 = vector.load %arg6[%c0_58, %c0_59] : memref<8x32xf32, #tpu.memory_space<vmem>>, vector<8x32xf32>
    tpu.vector_store %arg6[%c0_58, %c0_59], %176 {strides = array<i32>} : memref<8x32xf32, #tpu.memory_space<vmem>>, vector<8x32xf32>,
    return
  }
  func.func @transform_0(%arg0: i32, %arg1: memref<1xi32, #tpu.memory_space<smem>>) -> (i32, i32, i32) {
    %c0_i32 = arith.constant 0 : i32
    %c0_i32_0 = arith.constant 0 : i32
    %c0_i32_1 = arith.constant 0 : i32
    return %arg0, %c0_i32, %c0_i32_0 : i32, i32, i32
  }
  func.func @transform_1(%arg0: i32, %arg1: memref<1xi32, #tpu.memory_space<smem>>) -> (i32, i32) {
    %c0_i32 = arith.constant 0 : i32
    %c0_i32_0 = arith.constant 0 : i32
    %c0_i32_1 = arith.constant 0 : i32
    return %c0_i32, %c0_i32_0 : i32, i32
  }
  func.func @transform_2(%arg0: i32, %arg1: memref<1xi32, #tpu.memory_space<smem>>) -> (i32, i32) {
    %c0_i32 = arith.constant 0 : i32
    %c0_i32_0 = arith.constant 0 : i32
    %c0_i32_1 = arith.constant 0 : i32
    return %c0_i32, %c0_i32_0 : i32, i32
  }
  func.func @transform_3(%arg0: i32, %arg1: memref<1xi32, #tpu.memory_space<smem>>) -> (i32, i32) {
    %c0_i32 = arith.constant 0 : i32
    %c0_i32_0 = arith.constant 0 : i32
    %c0_i32_1 = arith.constant 0 : i32
    return %c0_i32, %c0_i32_0 : i32, i32
  }
  func.func @transform_4(%arg0: i32, %arg1: memref<1xi32, #tpu.memory_space<smem>>) -> (i32, i32) {
    %c0_i32 = arith.constant 0 : i32
    %c0_i32_0 = arith.constant 0 : i32
    return %arg0, %c0_i32 : i32, i32
  }
  func.func @transform_5(%arg0: i32, %arg1: memref<1xi32, #tpu.memory_space<smem>>) -> (i32, i32, i32) {
    %c0_i32 = arith.constant 0 : i32
    %c0_i32_0 = arith.constant 0 : i32
    %c0_i32_1 = arith.constant 0 : i32
    return %arg0, %c0_i32, %c0_i32_0 : i32, i32, i32
  }
}

</mosaic_0001>

<llo_original>
// kernel: nafa_forward.1
$region0: #{nafa_forward.1}
  #allocation0 [shape = 'u32[]', space=smem, size = 0x4, offset = 0x4, fixed_abs, tag = 'smem constant byte address 0x4 - core index']
  #allocation1 [shape = 'u32[144,128]{1,0:T(1,128)}', space=vmem, size = 0x12000, scoped, tag = 'internal scratch']
  #allocation2 [shape = 's32[1]{0}', space=sflag, size = 0x4, scoped, tag = 'scoped memory for nafa_forward.1']
  #allocation3 [shape = 's32[1]{0:T(128)S(6)}', space=smem, size = 0x200, scoped, tag = 'prefetched SMEM operand 0']
  #allocation4 [shape = 'f32[1,1]{1,0:T(1,128)S(1)}', space=vmem, size = 0x200, scoped, tag = 'scoped memory for nafa_forward.1']
  %s0 = inlined_call_operand.<no memory space> [shape: s32[1], index: 0, kind: input, shape index: {}]
  %s1 = inlined_call_operand.vmem [shape: f32[16,16,8], index: 1, kind: input, shape index: {}]
  %s2 = inlined_call_operand.vmem [shape: f32[5,8], index: 2, kind: input, shape index: {}]
  %s3 = inlined_call_operand.<no memory space> [shape: f32[1,1], index: 3, kind: input, shape index: {}]
  %s4 = inlined_call_operand.vmem [shape: f32[1,16], index: 4, kind: input, shape index: {}]
  %s5 = inlined_call_operand.vmem [shape: f32[16,32], index: 5, kind: output, shape index: {0}]
  %s6 = inlined_call_operand.vmem [shape: f32[16,16,8], index: 6, kind: output, shape index: {1}]
  %7 = xla_tuple %s5, %s6
  %s8 = sld [smem:[#allocation0]]
  $region57: #{nafa_forward.1} parent=0
    _
  %s10 = ssub.s32 1, %s8
  %s11 = scalar_select 0, %s10, %s8
  %12 = sst [smem:[#allocation3]] %s0
  %v13 = vstv %s3
  %14 = vst [vmem:[#allocation4] sm:$0x1] %v13
  loop: start=0, step=1, limit=4
  $region2: #{nafa_forward.1} parent=0 // loop_pre_header
    _
  $region3: #{nafa_forward.1} parent=0 // loop_header
    %s16 = sphi 0, %s20
    %p17 = scmp.ge.s32.totalorder %s16, 4
    %s26 = sphi 0, %s28
    %s29 = sphi 0, %s26
    %s30 = sphi 0, %s29
    %s46 = sphi 0, %s30
    %s50 = sphi 0, %s50
    %s52 = sphi 0, %s50
    %s53 = sphi 0, %s52
    %s67 = sphi 0, %s53
    %s71 = sphi 0, %s71
    %s73 = sphi 0, %s71
    %s74 = sphi 0, %s73
    %s88 = sphi 0, %s74
    %s92 = sphi 0, %s92
    %s94 = sphi 0, %s92
    %s95 = sphi 0, %s94
    %s109 = sphi 0, %s95
    %s115 = sphi 0, %s117
    %s118 = sphi 0, %s115
    %s119 = sphi 0, %s118
    %s135 = sphi 0, %s119
    %s141 = sphi 0, %s143
    %s144 = sphi 0, %s141
    %s145 = sphi 0, %s144
    %s161 = sphi 0, %s145
  $region4: #{nafa_forward.1} parent=0 // loop_header_branch
    %19 = sbr.rel (%p17) target = $region8
  $region5: #{nafa_forward.1} parent=0 // loop_body
    %s21 = ssub.s32 %s16, 1
    %s22 = ssub.s32 %s16, 2
    %s23 = sadd.s32 %s16, 1
    %s24 = ssub.s32 %s16, %s23
    %p25 = scmp.eq.s32.totalorder %s24, 0
    %s27 = sadd.s32 %s26, 1
    %s28 = scalar_select %p25, %s26, %s27
    %p31 = pneg %p25
    %p32 = scmp.eq.s32.totalorder %s16, 1
    %p33 = por %p31, %p32
    %p34 = scmp.ne.s32.totalorder %s26, %s29
    %p35 = scmp.eq.s32.totalorder %s16, 0
    %p36 = por %p34, %p35
    %p37 = scmp.ne.s32.totalorder %s26, %s29
    %p38 = scmp.eq.s32.totalorder %s21, 1
    %p39 = por %p37, %p38
    %p40 = scmp.ne.s32.totalorder %s29, %s30
    %p41 = scmp.eq.s32.totalorder %s21, 0
    %p42 = por %p40, %p41
    %p43 = scmp.ne.s32.totalorder %s29, %s30
    %p44 = scmp.eq.s32.totalorder %s22, 1
    %p45 = por %p43, %p44
    %p47 = scmp.ne.s32.totalorder %s30, %s46
    %p48 = scmp.eq.s32.totalorder %s22, 0
    %p49 = por %p47, %p48
    %s51 = sadd.s32 %s50, 1
    %p54 = scmp.eq.s32.totalorder %s16, 1
    %p55 = scmp.ne.s32.totalorder %s50, %s52
    %p56 = scmp.eq.s32.totalorder %s16, 0
    %p57 = por %p55, %p56
    %p58 = scmp.ne.s32.totalorder %s50, %s52
    %p59 = scmp.eq.s32.totalorder %s21, 1
    %p60 = por %p58, %p59
    %p61 = scmp.ne.s32.totalorder %s52, %s53
    %p62 = scmp.eq.s32.totalorder %s21, 0
    %p63 = por %p61, %p62
    %p64 = scmp.ne.s32.totalorder %s52, %s53
    %p65 = scmp.eq.s32.totalorder %s22, 1
    %p66 = por %p64, %p65
    %p68 = scmp.ne.s32.totalorder %s53, %s67
    %p69 = scmp.eq.s32.totalorder %s22, 0
    %p70 = por %p68, %p69
    %s72 = sadd.s32 %s71, 1
    %p75 = scmp.eq.s32.totalorder %s16, 1
    %p76 = scmp.ne.s32.totalorder %s71, %s73
    %p77 = scmp.eq.s32.totalorder %s16, 0
    %p78 = por %p76, %p77
    %p79 = scmp.ne.s32.totalorder %s71, %s73
    %p80 = scmp.eq.s32.totalorder %s21, 1
    %p81 = por %p79, %p80
    %p82 = scmp.ne.s32.totalorder %s73, %s74
    %p83 = scmp.eq.s32.totalorder %s21, 0
    %p84 = por %p82, %p83
    %p85 = scmp.ne.s32.totalorder %s73, %s74
    %p86 = scmp.eq.s32.totalorder %s22, 1
    %p87 = por %p85, %p86
    %p89 = scmp.ne.s32.totalorder %s74, %s88
    %p90 = scmp.eq.s32.totalorder %s22, 0
    %p91 = por %p89, %p90
    %s93 = sadd.s32 %s92, 1
    %p96 = scmp.eq.s32.totalorder %s16, 1
    %p97 = scmp.ne.s32.totalorder %s92, %s94
    %p98 = scmp.eq.s32.totalorder %s16, 0
    %p99 = por %p97, %p98
    %p100 = scmp.ne.s32.totalorder %s92, %s94
    %p101 = scmp.eq.s32.totalorder %s21, 1
    %p102 = por %p100, %p101
    %p103 = scmp.ne.s32.totalorder %s94, %s95
    %p104 = scmp.eq.s32.totalorder %s21, 0
    %p105 = por %p103, %p104
    %p106 = scmp.ne.s32.totalorder %s94, %s95
    %p107 = scmp.eq.s32.totalorder %s22, 1
    %p108 = por %p106, %p107
    %p110 = scmp.ne.s32.totalorder %s95, %s109
    %p111 = scmp.eq.s32.totalorder %s22, 0
    %p112 = por %p110, %p111
    %s113 = ssub.s32 %s16, %s23
    %p114 = scmp.eq.s32.totalorder %s113, 0
    %s116 = sadd.s32 %s115, 1
    %s117 = scalar_select %p114, %s115, %s116
    %p120 = pneg %p114
    %p121 = scmp.eq.s32.totalorder %s16, 1
    %p122 = por %p120, %p121
    %p123 = scmp.ne.s32.totalorder %s115, %s118
    %p124 = scmp.eq.s32.totalorder %s16, 0
    %p125 = por %p123, %p124
    %p126 = scmp.ne.s32.totalorder %s115, %s118
    %p127 = scmp.eq.s32.totalorder %s21, 1
    %p128 = por %p126, %p127
    %p129 = scmp.ne.s32.totalorder %s118, %s119
    %p130 = scmp.eq.s32.totalorder %s21, 0
    %p131 = por %p129, %p130
    %p132 = scmp.ne.s32.totalorder %s118, %s119
    %p133 = scmp.eq.s32.totalorder %s22, 1
    %p134 = por %p132, %p133
    %p136 = scmp.ne.s32.totalorder %s119, %s135
    %p137 = scmp.eq.s32.totalorder %s22, 0
    %p138 = por %p136, %p137
    %s139 = ssub.s32 %s16, %s23
    %p140 = scmp.eq.s32.totalorder %s139, 0
    %s142 = sadd.s32 %s141, 1
    %s143 = scalar_select %p140, %s141, %s142
    %p146 = pneg %p140
    %p147 = scmp.eq.s32.totalorder %s16, 1
    %p148 = por %p146, %p147
    %p149 = scmp.ne.s32.totalorder %s141, %s144
    %p150 = scmp.eq.s32.totalorder %s16, 0
    %p151 = por %p149, %p150
    %p152 = scmp.ne.s32.totalorder %s141, %s144
    %p153 = scmp.eq.s32.totalorder %s21, 1
    %p154 = por %p152, %p153
    %p155 = scmp.ne.s32.totalorder %s144, %s145
    %p156 = scmp.eq.s32.totalorder %s21, 0
    %p157 = por %p155, %p156
    %p158 = scmp.ne.s32.totalorder %s144, %s145
    %p159 = scmp.eq.s32.totalorder %s22, 1
    %p160 = por %p158, %p159
    %p162 = scmp.ne.s32.totalorder %s145, %s161
    %p163 = scmp.eq.s32.totalorder %s22, 0
    %p164 = por %p162, %p163
    %p165 = scmp.le.s32.totalorder 1, %s16
    %p166 = scmp.lt.s32.totalorder %s16, 3
    %p167 = pnand %p165, %p166
    %p168 = pneg %p167
    // Predicated region
    $region9: #{nafa_forward.1} parent=5 // pred_check
      _
    $region10: #{nafa_forward.1} parent=5 // pred_check_branch
      %170 = sbr.rel (%p167) target = $region12
    $region11: #{nafa_forward.1} parent=5 // pred_region
      %s171 = ssub.s32 %s16, 1
      // Predicated region
      $region13: #{nafa_forward.1} parent=11 // pred_check
        %p172 = pneg %p63
      $region14: #{nafa_forward.1} parent=11 // pred_check_branch
        %174 = sbr.rel (%p172) target = $region16
      $region15: #{nafa_forward.1} parent=11 // pred_region
        _
      $region16: #{nafa_forward.1} parent=11 // pred_fallthru
        _
      // Predicated region
      $region17: #{nafa_forward.1} parent=11 // pred_check
        %p175 = pneg %p84
      $region18: #{nafa_forward.1} parent=11 // pred_check_branch
        %177 = sbr.rel (%p175) target = $region20
      $region19: #{nafa_forward.1} parent=11 // pred_region
        _
      $region20: #{nafa_forward.1} parent=11 // pred_fallthru
        _
      // Predicated region
      $region21: #{nafa_forward.1} parent=11 // pred_check
        %p178 = pneg %p105
      $region22: #{nafa_forward.1} parent=11 // pred_check_branch
        %180 = sbr.rel (%p178) target = $region24
      $region23: #{nafa_forward.1} parent=11 // pred_region
        _
      $region24: #{nafa_forward.1} parent=11 // pred_fallthru
        _
    $region12: #{nafa_forward.1} parent=5 // pred_fallthru
      _
    %p181 = scmp.lt.s32.totalorder %s16, 2
    // Predicated region
    $region25: #{nafa_forward.1} parent=5 // pred_check
      %p182 = pneg %p181
    $region26: #{nafa_forward.1} parent=5 // pred_check_branch
      %184 = sbr.rel (%p182) target = $region28
    $region27: #{nafa_forward.1} parent=5 // pred_region
      // Predicated region
      $region29: #{nafa_forward.1} parent=27 // pred_check
        %p185 = pneg %p36
      $region30: #{nafa_forward.1} parent=27 // pred_check_branch
        %187 = sbr.rel (%p185) target = $region32
      $region31: #{nafa_forward.1} parent=27 // pred_region
        %s188 = smul.u32 8, %s16
        %p189 = scmp.lt.s32.totalorder %s188, 15
        %s190 = scalar_select %p189, %s188, 15
        %s191 = smul.addr %s190, 2
        %s192 = smul.addr %s191, 8
        %s193 = scalar_lea.vmem %s1, %s192
        %s194 = smul.u32 8, %s16
      $region32: #{nafa_forward.1} parent=27 // pred_fallthru
        _
    $region28: #{nafa_forward.1} parent=5 // pred_fallthru
      _
    %p195 = scmp.le.s32.totalorder 1, %s16
    %p196 = scmp.lt.s32.totalorder %s16, 3
    %p197 = pnand %p195, %p196
    %p198 = pneg %p197
    // Predicated region
    $region33: #{nafa_forward.1} parent=5 // pred_check
      _
    $region34: #{nafa_forward.1} parent=5 // pred_check_branch
      %200 = sbr.rel (%p197) target = $region36
    $region35: #{nafa_forward.1} parent=5 // pred_region
      %s201 = ssub.s32 %s16, 1
      %s202 = smul.u32 8, %s21
      %p203 = scmp.lt.s32.totalorder %s202, 15
      %s204 = scalar_select %p203, %s202, 15
      %s205 = smul.addr %s204, 2
      %s206 = smul.addr %s205, 8
      %s207 = scalar_lea.vmem %s1, %s206
      %p208 = pneg %p42
      %p209 = pneg %p39
      %p210 = pneg %p63
      %p211 = pneg %p60
      %p212 = pneg %p84
      %p213 = pneg %p81
      %p214 = pneg %p105
      %p215 = pneg %p102
      %p216 = pneg %p131
      %p217 = pneg %p128
      %p218 = scmp.lt.s32.totalorder %s21, 1
      %s219 = scalar_select %p218, %s21, 1
      %s220 = smul.addr %s219, 8
      %s221 = scalar_lea.vmem %s5, %s220
      %p222 = pneg %p157
      %p223 = pneg %p154
      %s224 = smul.u32 8, %s21
      %p225 = scmp.lt.s32.totalorder %s224, 15
      %s226 = scalar_select %p225, %s224, 15
      %s227 = smul.addr %s226, 2
      %s228 = smul.addr %s227, 8
      %s229 = scalar_lea.vmem %s6, %s228
      %s230 = smul.u32 8, %s21
      %p231 = scmp.lt.s32.totalorder %s230, 15
      %s232 = scalar_select %p231, %s230, 15
      %s233 = smul.addr %s232, 2
      %s234 = smul.addr %s233, 8
      %s235 = scalar_lea.vmem %s1, %s234
      %s236 = smul.u32 8, %s21
      %p237 = scmp.lt.s32.totalorder %s21, 1
      %s238 = scalar_select %p237, %s21, 1
      %s239 = smul.addr %s238, 8
      %s240 = scalar_lea.vmem %s5, %s239
      %s241 = smul.u32 8, %s21
      %p242 = scmp.lt.s32.totalorder %s241, 15
      %s243 = scalar_select %p242, %s241, 15
      %s244 = smul.addr %s243, 2
      %s245 = smul.addr %s244, 8
      %s246 = scalar_lea.vmem %s6, %s245
      %s247 = smul.u32 8, %s21
      %v248 = vld [vmem:[%s235] sm:$0xff]
      %v249 = vld [vmem:[%s235 + $0x8] sm:$0xff]
      %v250 = vld [vmem:[%s235 + $0x10] sm:$0xff]
      %v251 = vld [vmem:[%s235 + $0x18] sm:$0xff]
      %v252 = vld [vmem:[%s235 + $0x20] sm:$0xff]
      %v253 = vld [vmem:[%s235 + $0x28] sm:$0xff]
      %v254 = vld [vmem:[%s235 + $0x30] sm:$0xff]
      %v255 = vld [vmem:[%s235 + $0x38] sm:$0xff]
      %v256 = vld [vmem:[%s235 + $0x40] sm:$0xff]
      %v257 = vld [vmem:[%s235 + $0x48] sm:$0xff]
      %v258 = vld [vmem:[%s235 + $0x50] sm:$0xff]
      %v259 = vld [vmem:[%s235 + $0x58] sm:$0xff]
      %v260 = vld [vmem:[%s235 + $0x60] sm:$0xff]
      %v261 = vld [vmem:[%s235 + $0x68] sm:$0xff]
      %v262 = vld [vmem:[%s235 + $0x70] sm:$0xff]
      %v263 = vld [vmem:[%s235 + $0x78] sm:$0xff]
      %v264 = vld [vmem:[%s2] sm:$0x1f]
      %v265 = vlaneseq
      %v266 = vshrl.u32 %v265, 7
      %v267 = vadd.s32 %v266, 8
      %v268 = vrot.slane %v248, 6
      %v269 = vrot.slane %v250, 6
      %v270 = vrot.slane %v252, 6
      %v271 = vrot.slane %v254, 6
      %v272 = vrot.slane %v256, 6
      %v273 = vrot.slane %v258, 6
      %v274 = vrot.slane %v260, 6
      %v275 = vrot.slane %v262, 6
      %v276 = vrot.slane %v249, 6
      %v277 = vrot.slane %v251, 6
      %v278 = vrot.slane %v253, 6
      %v279 = vrot.slane %v255, 6
      %v280 = vrot.slane %v257, 6
      %v281 = vrot.slane %v259, 6
      %v282 = vrot.slane %v261, 6
      %v283 = vrot.slane %v263, 6
      %vm284 = vcmp.lt.s32.totalorder %v266, 2
      %v285 = vsel %vm284, %v268, %v276
      %v286 = vsel %vm284, %v269, %v277
      %v287 = vsel %vm284, %v270, %v278
      %v288 = vsel %vm284, %v271, %v279
      %v289 = vsel %vm284, %v272, %v280
      %v290 = vsel %vm284, %v273, %v281
      %v291 = vsel %vm284, %v274, %v282
      %v292 = vsel %vm284, %v275, %v283
      %v293 = vsel %vm284, %v276, %v268
      %v294 = vsel %vm284, %v277, %v269
      %v295 = vsel %vm284, %v278, %v270
      %v296 = vsel %vm284, %v279, %v271
      %v297 = vsel %vm284, %v280, %v272
      %v298 = vsel %vm284, %v281, %v273
      %v299 = vsel %vm284, %v282, %v274
      %v300 = vsel %vm284, %v283, %v275
      %v301 = vadd.s32 %v266, 4294967294
      %v302 = vadd.s32 %v267, 4294967294
      %vm303 = vcmp.ge.s32.totalorder %v301, 0
      %vm304 = vcmp.ge.s32.totalorder %v302, 0
      %vm305 = vcmp.lt.s32.totalorder %v301, 16
      %vm306 = vcmp.lt.s32.totalorder %v302, 16
      %vm307 = vmand %vm303, %vm305
      %vm308 = vmand %vm304, %vm306
      %v309 = vsel %vm307, %v293, 0.0
      %v310 = vsel %vm308, %v285, 0.0
      %v311 = vsel %vm307, %v294, 0.0
      %v312 = vsel %vm308, %v286, 0.0
      %v313 = vsel %vm307, %v295, 0.0
      %v314 = vsel %vm308, %v287, 0.0
      %v315 = vsel %vm307, %v296, 0.0
      %v316 = vsel %vm308, %v288, 0.0
      %v317 = vsel %vm307, %v297, 0.0
      %v318 = vsel %vm308, %v289, 0.0
      %v319 = vsel %vm307, %v298, 0.0
      %v320 = vsel %vm308, %v290, 0.0
      %v321 = vsel %vm307, %v299, 0.0
      %v322 = vsel %vm308, %v291, 0.0
      %v323 = vsel %vm307, %v300, 0.0
      %v324 = vsel %vm308, %v292, 0.0
      %v325 = vlaneseq
      %v326 = vshrl.u32 %v325, 7
      %v327 = vsub.s32 0, %v326
      %v328 = vrot.slane %v264, %v327
      %v329 = vmul.f32 %v309, %v328
      %v330 = vmul.f32 %v310, %v328
      %v331 = vmul.f32 %v311, %v328
      %v332 = vmul.f32 %v312, %v328
      %v333 = vmul.f32 %v313, %v328
      %v334 = vmul.f32 %v314, %v328
      %v335 = vmul.f32 %v315, %v328
      %v336 = vmul.f32 %v316, %v328
      %v337 = vmul.f32 %v317, %v328
      %v338 = vmul.f32 %v318, %v328
      %v339 = vmul.f32 %v319, %v328
      %v340 = vmul.f32 %v320, %v328
      %v341 = vmul.f32 %v321, %v328
      %v342 = vmul.f32 %v322, %v328
      %v343 = vmul.f32 %v323, %v328
      %v344 = vmul.f32 %v324, %v328
      %v345 = vadd.f32 %v329, 0.0
      %v346 = vadd.f32 %v330, 0.0
      %v347 = vadd.f32 %v331, 0.0
      %v348 = vadd.f32 %v332, 0.0
      %v349 = vadd.f32 %v333, 0.0
      %v350 = vadd.f32 %v334, 0.0
      %v351 = vadd.f32 %v335, 0.0
      %v352 = vadd.f32 %v336, 0.0
      %v353 = vadd.f32 %v337, 0.0
      %v354 = vadd.f32 %v338, 0.0
      %v355 = vadd.f32 %v339, 0.0
      %v356 = vadd.f32 %v340, 0.0
      %v357 = vadd.f32 %v341, 0.0
      %v358 = vadd.f32 %v342, 0.0
      %v359 = vadd.f32 %v343, 0.0
      %v360 = vadd.f32 %v344, 0.0
      %v361 = vrot.slane %v248, 7
      %v362 = vrot.slane %v250, 7
      %v363 = vrot.slane %v252, 7
      %v364 = vrot.slane %v254, 7
      %v365 = vrot.slane %v256, 7
      %v366 = vrot.slane %v258, 7
      %v367 = vrot.slane %v260, 7
      %v368 = vrot.slane %v262, 7
      %v369 = vrot.slane %v249, 7
      %v370 = vrot.slane %v251, 7
      %v371 = vrot.slane %v253, 7
      %v372 = vrot.slane %v255, 7
      %v373 = vrot.slane %v257, 7
      %v374 = vrot.slane %v259, 7
      %v375 = vrot.slane %v261, 7
      %v376 = vrot.slane %v263, 7
      %vm377 = vcmp.lt.s32.totalorder %v266, 1
      %v378 = vsel %vm377, %v361, %v369
      %v379 = vsel %vm377, %v362, %v370
      %v380 = vsel %vm377, %v363, %v371
      %v381 = vsel %vm377, %v364, %v372
      %v382 = vsel %vm377, %v365, %v373
      %v383 = vsel %vm377, %v366, %v374
      %v384 = vsel %vm377, %v367, %v375
      %v385 = vsel %vm377, %v368, %v376
      %v386 = vsel %vm377, %v369, %v361
      %v387 = vsel %vm377, %v370, %v362
      %v388 = vsel %vm377, %v371, %v363
      %v389 = vsel %vm377, %v372, %v364
      %v390 = vsel %vm377, %v373, %v365
      %v391 = vsel %vm377, %v374, %v366
      %v392 = vsel %vm377, %v375, %v367
      %v393 = vsel %vm377, %v376, %v368
      %v394 = vadd.s32 %v266, 4294967295
      %v395 = vadd.s32 %v267, 4294967295
      %vm396 = vcmp.ge.s32.totalorder %v394, 0
      %vm397 = vcmp.ge.s32.totalorder %v395, 0
      %vm398 = vcmp.lt.s32.totalorder %v394, 16
      %vm399 = vcmp.lt.s32.totalorder %v395, 16
      %vm400 = vmand %vm396, %vm398
      %vm401 = vmand %vm397, %vm399
      %v402 = vsel %vm400, %v386, 0.0
      %v403 = vsel %vm401, %v378, 0.0
      %v404 = vsel %vm400, %v387, 0.0
      %v405 = vsel %vm401, %v379, 0.0
      %v406 = vsel %vm400, %v388, 0.0
      %v407 = vsel %vm401, %v380, 0.0
      %v408 = vsel %vm400, %v389, 0.0
      %v409 = vsel %vm401, %v381, 0.0
      %v410 = vsel %vm400, %v390, 0.0
      %v411 = vsel %vm401, %v382, 0.0
      %v412 = vsel %vm400, %v391, 0.0
      %v413 = vsel %vm401, %v383, 0.0
      %v414 = vsel %vm400, %v392, 0.0
      %v415 = vsel %vm401, %v384, 0.0
      %v416 = vsel %vm400, %v393, 0.0
      %v417 = vsel %vm401, %v385, 0.0
      %v418 = vlaneseq
      %v419 = vshrl.u32 %v418, 7
      %v420 = vsub.s32 1, %v419
      %v421 = vrot.slane %v264, %v420
      %v422 = vmul.f32 %v402, %v421
      %v423 = vmul.f32 %v403, %v421
      %v424 = vmul.f32 %v404, %v421
      %v425 = vmul.f32 %v405, %v421
      %v426 = vmul.f32 %v406, %v421
      %v427 = vmul.f32 %v407, %v421
      %v428 = vmul.f32 %v408, %v421
      %v429 = vmul.f32 %v409, %v421
      %v430 = vmul.f32 %v410, %v421
      %v431 = vmul.f32 %v411, %v421
      %v432 = vmul.f32 %v412, %v421
      %v433 = vmul.f32 %v413, %v421
      %v434 = vmul.f32 %v414, %v421
      %v435 = vmul.f32 %v415, %v421
      %v436 = vmul.f32 %v416, %v421
      %v437 = vmul.f32 %v417, %v421
      %v438 = vadd.f32 %v345, %v422
      %v439 = vadd.f32 %v346, %v423
      %v440 = vadd.f32 %v347, %v424
      %v441 = vadd.f32 %v348, %v425
      %v442 = vadd.f32 %v349, %v426
      %v443 = vadd.f32 %v350, %v427
      %v444 = vadd.f32 %v351, %v428
      %v445 = vadd.f32 %v352, %v429
      %v446 = vadd.f32 %v353, %v430
      %v447 = vadd.f32 %v354, %v431
      %v448 = vadd.f32 %v355, %v432
      %v449 = vadd.f32 %v356, %v433
      %v450 = vadd.f32 %v357, %v434
      %v451 = vadd.f32 %v358, %v435
      %v452 = vadd.f32 %v359, %v436
      %v453 = vadd.f32 %v360, %v437
      %vm454 = vcmp.ge.s32.totalorder %v266, 0
      %vm455 = vcmp.ge.s32.totalorder %v267, 0
      %vm456 = vcmp.lt.s32.totalorder %v266, 16
      %vm457 = vcmp.lt.s32.totalorder %v267, 16
      %vm458 = vmand %vm454, %vm456
      %vm459 = vmand %vm455, %vm457
      %v460 = vsel %vm458, %v248, 0.0
      %v461 = vsel %vm459, %v249, 0.0
      %v462 = vsel %vm458, %v250, 0.0
      %v463 = vsel %vm459, %v251, 0.0
      %v464 = vsel %vm458, %v252, 0.0
      %v465 = vsel %vm459, %v253, 0.0
      %v466 = vsel %vm458, %v254, 0.0
      %v467 = vsel %vm459, %v255, 0.0
      %v468 = vsel %vm458, %v256, 0.0
      %v469 = vsel %vm459, %v257, 0.0
      %v470 = vsel %vm458, %v258, 0.0
      %v471 = vsel %vm459, %v259, 0.0
      %v472 = vsel %vm458, %v260, 0.0
      %v473 = vsel %vm459, %v261, 0.0
      %v474 = vsel %vm458, %v262, 0.0
      %v475 = vsel %vm459, %v263, 0.0
      %v476 = vlaneseq
      %v477 = vshrl.u32 %v476, 7
      %v478 = vsub.s32 2, %v477
      %v479 = vrot.slane %v264, %v478
      %v480 = vmul.f32 %v460, %v479
      %v481 = vmul.f32 %v461, %v479
      %v482 = vmul.f32 %v462, %v479
      %v483 = vmul.f32 %v463, %v479
      %v484 = vmul.f32 %v464, %v479
      %v485 = vmul.f32 %v465, %v479
      %v486 = vmul.f32 %v466, %v479
      %v487 = vmul.f32 %v467, %v479
      %v488 = vmul.f32 %v468, %v479
      %v489 = vmul.f32 %v469, %v479
      %v490 = vmul.f32 %v470, %v479
      %v491 = vmul.f32 %v471, %v479
      %v492 = vmul.f32 %v472, %v479
      %v493 = vmul.f32 %v473, %v479
      %v494 = vmul.f32 %v474, %v479
      %v495 = vmul.f32 %v475, %v479
      %v496 = vadd.f32 %v438, %v480
      %v497 = vadd.f32 %v439, %v481
      %v498 = vadd.f32 %v440, %v482
      %v499 = vadd.f32 %v441, %v483
      %v500 = vadd.f32 %v442, %v484
      %v501 = vadd.f32 %v443, %v485
      %v502 = vadd.f32 %v444, %v486
      %v503 = vadd.f32 %v445, %v487
      %v504 = vadd.f32 %v446, %v488
      %v505 = vadd.f32 %v447, %v489
      %v506 = vadd.f32 %v448, %v490
      %v507 = vadd.f32 %v449, %v491
      %v508 = vadd.f32 %v450, %v492
      %v509 = vadd.f32 %v451, %v493
      %v510 = vadd.f32 %v452, %v494
      %v511 = vadd.f32 %v453, %v495
      %v512 = vrot.slane %v248, 1
      %v513 = vrot.slane %v250, 1
      %v514 = vrot.slane %v252, 1
      %v515 = vrot.slane %v254, 1
      %v516 = vrot.slane %v256, 1
      %v517 = vrot.slane %v258, 1
      %v518 = vrot.slane %v260, 1
      %v519 = vrot.slane %v262, 1
      %v520 = vrot.slane %v249, 1
      %v521 = vrot.slane %v251, 1
      %v522 = vrot.slane %v253, 1
      %v523 = vrot.slane %v255, 1
      %v524 = vrot.slane %v257, 1
      %v525 = vrot.slane %v259, 1
      %v526 = vrot.slane %v261, 1
      %v527 = vrot.slane %v263, 1
      %vm528 = vcmp.lt.s32.totalorder %v266, 7
      %v529 = vsel %vm528, %v512, %v520
      %v530 = vsel %vm528, %v513, %v521
      %v531 = vsel %vm528, %v514, %v522
      %v532 = vsel %vm528, %v515, %v523
      %v533 = vsel %vm528, %v516, %v524
      %v534 = vsel %vm528, %v517, %v525
      %v535 = vsel %vm528, %v518, %v526
      %v536 = vsel %vm528, %v519, %v527
      %v537 = vsel %vm528, %v520, %v512
      %v538 = vsel %vm528, %v521, %v513
      %v539 = vsel %vm528, %v522, %v514
      %v540 = vsel %vm528, %v523, %v515
      %v541 = vsel %vm528, %v524, %v516
      %v542 = vsel %vm528, %v525, %v517
      %v543 = vsel %vm528, %v526, %v518
      %v544 = vsel %vm528, %v527, %v519
      %v545 = vadd.s32 %v266, 1
      %v546 = vadd.s32 %v267, 1
      %vm547 = vcmp.ge.s32.totalorder %v545, 0
      %vm548 = vcmp.ge.s32.totalorder %v546, 0
      %vm549 = vcmp.lt.s32.totalorder %v545, 16
      %vm550 = vcmp.lt.s32.totalorder %v546, 16
      %vm551 = vmand %vm547, %vm549
      %vm552 = vmand %vm548, %vm550
      %v553 = vsel %vm551, %v529, 0.0
      %v554 = vsel %vm552, %v537, 0.0
      %v555 = vsel %vm551, %v530, 0.0
      %v556 = vsel %vm552, %v538, 0.0
      %v557 = vsel %vm551, %v531, 0.0
      %v558 = vsel %vm552, %v539, 0.0
      %v559 = vsel %vm551, %v532, 0.0
      %v560 = vsel %vm552, %v540, 0.0
      %v561 = vsel %vm551, %v533, 0.0
      %v562 = vsel %vm552, %v541, 0.0
      %v563 = vsel %vm551, %v534, 0.0
      %v564 = vsel %vm552, %v542, 0.0
      %v565 = vsel %vm551, %v535, 0.0
      %v566 = vsel %vm552, %v543, 0.0
      %v567 = vsel %vm551, %v536, 0.0
      %v568 = vsel %vm552, %v544, 0.0
      %v569 = vlaneseq
      %v570 = vshrl.u32 %v569, 7
      %v571 = vsub.s32 3, %v570
      %v572 = vrot.slane %v264, %v571
      %v573 = vmul.f32 %v553, %v572
      %v574 = vmul.f32 %v554, %v572
      %v575 = vmul.f32 %v555, %v572
      %v576 = vmul.f32 %v556, %v572
      %v577 = vmul.f32 %v557, %v572
      %v578 = vmul.f32 %v558, %v572
      %v579 = vmul.f32 %v559, %v572
      %v580 = vmul.f32 %v560, %v572
      %v581 = vmul.f32 %v561, %v572
      %v582 = vmul.f32 %v562, %v572
      %v583 = vmul.f32 %v563, %v572
      %v584 = vmul.f32 %v564, %v572
      %v585 = vmul.f32 %v565, %v572
      %v586 = vmul.f32 %v566, %v572
      %v587 = vmul.f32 %v567, %v572
      %v588 = vmul.f32 %v568, %v572
      %v589 = vadd.f32 %v496, %v573
      %v590 = vadd.f32 %v497, %v574
      %v591 = vadd.f32 %v498, %v575
      %v592 = vadd.f32 %v499, %v576
      %v593 = vadd.f32 %v500, %v577
      %v594 = vadd.f32 %v501, %v578
      %v595 = vadd.f32 %v502, %v579
      %v596 = vadd.f32 %v503, %v580
      %v597 = vadd.f32 %v504, %v581
      %v598 = vadd.f32 %v505, %v582
      %v599 = vadd.f32 %v506, %v583
      %v600 = vadd.f32 %v507, %v584
      %v601 = vadd.f32 %v508, %v585
      %v602 = vadd.f32 %v509, %v586
      %v603 = vadd.f32 %v510, %v587
      %v604 = vadd.f32 %v511, %v588
      %v605 = vrot.slane %v248, 2
      %v606 = vrot.slane %v250, 2
      %v607 = vrot.slane %v252, 2
      %v608 = vrot.slane %v254, 2
      %v609 = vrot.slane %v256, 2
      %v610 = vrot.slane %v258, 2
      %v611 = vrot.slane %v260, 2
      %v612 = vrot.slane %v262, 2
      %v613 = vrot.slane %v249, 2
      %v614 = vrot.slane %v251, 2
      %v615 = vrot.slane %v253, 2
      %v616 = vrot.slane %v255, 2
      %v617 = vrot.slane %v257, 2
      %v618 = vrot.slane %v259, 2
      %v619 = vrot.slane %v261, 2
      %v620 = vrot.slane %v263, 2
      %vm621 = vcmp.lt.s32.totalorder %v266, 6
      %v622 = vsel %vm621, %v605, %v613
      %v623 = vsel %vm621, %v606, %v614
      %v624 = vsel %vm621, %v607, %v615
      %v625 = vsel %vm621, %v608, %v616
      %v626 = vsel %vm621, %v609, %v617
      %v627 = vsel %vm621, %v610, %v618
      %v628 = vsel %vm621, %v611, %v619
      %v629 = vsel %vm621, %v612, %v620
      %v630 = vsel %vm621, %v613, %v605
      %v631 = vsel %vm621, %v614, %v606
      %v632 = vsel %vm621, %v615, %v607
      %v633 = vsel %vm621, %v616, %v608
      %v634 = vsel %vm621, %v617, %v609
      %v635 = vsel %vm621, %v618, %v610
      %v636 = vsel %vm621, %v619, %v611
      %v637 = vsel %vm621, %v620, %v612
      %v638 = vadd.s32 %v266, 2
      %v639 = vadd.s32 %v267, 2
      %vm640 = vcmp.ge.s32.totalorder %v638, 0
      %vm641 = vcmp.ge.s32.totalorder %v639, 0
      %vm642 = vcmp.lt.s32.totalorder %v638, 16
      %vm643 = vcmp.lt.s32.totalorder %v639, 16
      %vm644 = vmand %vm640, %vm642
      %vm645 = vmand %vm641, %vm643
      %v646 = vsel %vm644, %v622, 0.0
      %v647 = vsel %vm645, %v630, 0.0
      %v648 = vsel %vm644, %v623, 0.0
      %v649 = vsel %vm645, %v631, 0.0
      %v650 = vsel %vm644, %v624, 0.0
      %v651 = vsel %vm645, %v632, 0.0
      %v652 = vsel %vm644, %v625, 0.0
      %v653 = vsel %vm645, %v633, 0.0
      %v654 = vsel %vm644, %v626, 0.0
      %v655 = vsel %vm645, %v634, 0.0
      %v656 = vsel %vm644, %v627, 0.0
      %v657 = vsel %vm645, %v635, 0.0
      %v658 = vsel %vm644, %v628, 0.0
      %v659 = vsel %vm645, %v636, 0.0
      %v660 = vsel %vm644, %v629, 0.0
      %v661 = vsel %vm645, %v637, 0.0
      %v662 = vlaneseq
      %v663 = vshrl.u32 %v662, 7
      %v664 = vsub.s32 4, %v663
      %v665 = vrot.slane %v264, %v664
      %v666 = vmul.f32 %v646, %v665
      %v667 = vmul.f32 %v647, %v665
      %v668 = vmul.f32 %v648, %v665
      %v669 = vmul.f32 %v649, %v665
      %v670 = vmul.f32 %v650, %v665
      %v671 = vmul.f32 %v651, %v665
      %v672 = vmul.f32 %v652, %v665
      %v673 = vmul.f32 %v653, %v665
      %v674 = vmul.f32 %v654, %v665
      %v675 = vmul.f32 %v655, %v665
      %v676 = vmul.f32 %v656, %v665
      %v677 = vmul.f32 %v657, %v665
      %v678 = vmul.f32 %v658, %v665
      %v679 = vmul.f32 %v659, %v665
      %v680 = vmul.f32 %v660, %v665
      %v681 = vmul.f32 %v661, %v665
      %v682 = vadd.f32 %v589, %v666
      %v683 = vadd.f32 %v590, %v667
      %v684 = vadd.f32 %v591, %v668
      %v685 = vadd.f32 %v592, %v669
      %v686 = vadd.f32 %v593, %v670
      %v687 = vadd.f32 %v594, %v671
      %v688 = vadd.f32 %v595, %v672
      %v689 = vadd.f32 %v596, %v673
      %v690 = vadd.f32 %v597, %v674
      %v691 = vadd.f32 %v598, %v675
      %v692 = vadd.f32 %v599, %v676
      %v693 = vadd.f32 %v600, %v677
      %v694 = vadd.f32 %v601, %v678
      %v695 = vadd.f32 %v602, %v679
      %v696 = vadd.f32 %v603, %v680
      %v697 = vadd.f32 %v604, %v681
      %vm698 = vcmask 64512
      %v699 = vsel %vm698, %v682, 0.0
      %700 = vadd.xlane.f32.xlu0 %v699
      %v701 = vpop.xlane.xlu0 %700
      %v702 = vsel %vm698, %v683, 0.0
      %703 = vadd.xlane.f32.xlu0 %v702
      %v704 = vpop.xlane.xlu0 %703
      %v705 = vsel %vm698, %v684, 0.0
      %706 = vadd.xlane.f32.xlu0 %v705
      %v707 = vpop.xlane.xlu0 %706
      %v708 = vsel %vm698, %v685, 0.0
      %709 = vadd.xlane.f32.xlu0 %v708
      %v710 = vpop.xlane.xlu0 %709
      %v711 = vsel %vm698, %v686, 0.0
      %712 = vadd.xlane.f32.xlu0 %v711
      %v713 = vpop.xlane.xlu0 %712
      %v714 = vsel %vm698, %v687, 0.0
      %715 = vadd.xlane.f32.xlu0 %v714
      %v716 = vpop.xlane.xlu0 %715
      %v717 = vsel %vm698, %v688, 0.0
      %718 = vadd.xlane.f32.xlu0 %v717
      %v719 = vpop.xlane.xlu0 %718
      %v720 = vsel %vm698, %v689, 0.0
      %721 = vadd.xlane.f32.xlu0 %v720
      %v722 = vpop.xlane.xlu0 %721
      %v723 = vsel %vm698, %v690, 0.0
      %724 = vadd.xlane.f32.xlu0 %v723
      %v725 = vpop.xlane.xlu0 %724
      %v726 = vsel %vm698, %v691, 0.0
      %727 = vadd.xlane.f32.xlu0 %v726
      %v728 = vpop.xlane.xlu0 %727
      %v729 = vsel %vm698, %v692, 0.0
      %730 = vadd.xlane.f32.xlu0 %v729
      %v731 = vpop.xlane.xlu0 %730
      %v732 = vsel %vm698, %v693, 0.0
      %733 = vadd.xlane.f32.xlu0 %v732
      %v734 = vpop.xlane.xlu0 %733
      %v735 = vsel %vm698, %v694, 0.0
      %736 = vadd.xlane.f32.xlu0 %v735
      %v737 = vpop.xlane.xlu0 %736
      %v738 = vsel %vm698, %v695, 0.0
      %739 = vadd.xlane.f32.xlu0 %v738
      %v740 = vpop.xlane.xlu0 %739
      %v741 = vsel %vm698, %v696, 0.0
      %742 = vadd.xlane.f32.xlu0 %v741
      %v743 = vpop.xlane.xlu0 %742
      %v744 = vsel %vm698, %v697, 0.0
      %745 = vadd.xlane.f32.xlu0 %v744
      %v746 = vpop.xlane.xlu0 %745
      %v747 = vld [vmem:[#allocation4] sm:$0x1]
      %v749 = vlaneseq
      %v750 = vshrl.u32 %v749, 7
      %v751 = vsub.s32 0, %v750
      %v752 = vrot.slane %v747, %v751
      %753 = vset.pattern.permute.xlu0 0
      %754 = vperm.xlu0 %753, %v752
      %v755 = vpop.permute.xlu0 %754
      %v757 = vadd.f32 %v701, %v755
      %v758 = vadd.f32 %v704, %v755
      %v759 = vadd.f32 %v707, %v755
      %v760 = vadd.f32 %v710, %v755
      %v761 = vadd.f32 %v713, %v755
      %v762 = vadd.f32 %v716, %v755
      %v763 = vadd.f32 %v719, %v755
      %v764 = vadd.f32 %v722, %v755
      %v765 = vadd.f32 %v725, %v755
      %v766 = vadd.f32 %v728, %v755
      %v767 = vadd.f32 %v731, %v755
      %v768 = vadd.f32 %v734, %v755
      %v769 = vadd.f32 %v737, %v755
      %v770 = vadd.f32 %v740, %v755
      %v771 = vadd.f32 %v743, %v755
      %v772 = vadd.f32 %v746, %v755
      %v773 = vxor.u32 %v757, 2147483648
      %v774 = vxor.u32 %v758, 2147483648
      %v775 = vxor.u32 %v759, 2147483648
      %v776 = vxor.u32 %v760, 2147483648
      %v777 = vxor.u32 %v761, 2147483648
      %v778 = vxor.u32 %v762, 2147483648
      %v779 = vxor.u32 %v763, 2147483648
      %v780 = vxor.u32 %v764, 2147483648
      %v781 = vxor.u32 %v765, 2147483648
      %v782 = vxor.u32 %v766, 2147483648
      %v783 = vxor.u32 %v767, 2147483648
      %v784 = vxor.u32 %v768, 2147483648
      %v785 = vxor.u32 %v769, 2147483648
      %v786 = vxor.u32 %v770, 2147483648
      %v787 = vxor.u32 %v771, 2147483648
      %v788 = vxor.u32 %v772, 2147483648
      %v789 = vmul.f32 %v773, 1.442695
      %v790 = vpow.pop %v789
      %v791 = vmul.f32 %v774, 1.442695
      %v792 = vpow.pop %v791
      %v793 = vmul.f32 %v775, 1.442695
      %v794 = vpow.pop %v793
      %v795 = vmul.f32 %v776, 1.442695
      %v796 = vpow.pop %v795
      %v797 = vmul.f32 %v777, 1.442695
      %v798 = vpow.pop %v797
      %v799 = vmul.f32 %v778, 1.442695
      %v800 = vpow.pop %v799
      %v801 = vmul.f32 %v779, 1.442695
      %v802 = vpow.pop %v801
      %v803 = vmul.f32 %v780, 1.442695
      %v804 = vpow.pop %v803
      %v805 = vmul.f32 %v781, 1.442695
      %v806 = vpow.pop %v805
      %v807 = vmul.f32 %v782, 1.442695
      %v808 = vpow.pop %v807
      %v809 = vmul.f32 %v783, 1.442695
      %v810 = vpow.pop %v809
      %v811 = vmul.f32 %v784, 1.442695
      %v812 = vpow.pop %v811
      %v813 = vmul.f32 %v785, 1.442695
      %v814 = vpow.pop %v813
      %v815 = vmul.f32 %v786, 1.442695
      %v816 = vpow.pop %v815
      %v817 = vmul.f32 %v787, 1.442695
      %v818 = vpow.pop %v817
      %v819 = vmul.f32 %v788, 1.442695
      %v820 = vpow.pop %v819
      %v821 = vadd.f32 %v790, 1.0
      %v822 = vadd.f32 %v792, 1.0
      %v823 = vadd.f32 %v794, 1.0
      %v824 = vadd.f32 %v796, 1.0
      %v825 = vadd.f32 %v798, 1.0
      %v826 = vadd.f32 %v800, 1.0
      %v827 = vadd.f32 %v802, 1.0
      %v828 = vadd.f32 %v804, 1.0
      %v829 = vadd.f32 %v806, 1.0
      %v830 = vadd.f32 %v808, 1.0
      %v831 = vadd.f32 %v810, 1.0
      %v832 = vadd.f32 %v812, 1.0
      %v833 = vadd.f32 %v814, 1.0
      %v834 = vadd.f32 %v816, 1.0
      %v835 = vadd.f32 %v818, 1.0
      %v836 = vadd.f32 %v820, 1.0
      %v837 = vrcp.pop %v821
      %v838 = vmul.f32 1.0, %v837
      %v839 = vrcp.pop %v822
      %v840 = vmul.f32 1.0, %v839
      %v841 = vrcp.pop %v823
      %v842 = vmul.f32 1.0, %v841
      %v843 = vrcp.pop %v824
      %v844 = vmul.f32 1.0, %v843
      %v845 = vrcp.pop %v825
      %v846 = vmul.f32 1.0, %v845
      %v847 = vrcp.pop %v826
      %v848 = vmul.f32 1.0, %v847
      %v849 = vrcp.pop %v827
      %v850 = vmul.f32 1.0, %v849
      %v851 = vrcp.pop %v828
      %v852 = vmul.f32 1.0, %v851
      %v853 = vrcp.pop %v829
      %v854 = vmul.f32 1.0, %v853
      %v855 = vrcp.pop %v830
      %v856 = vmul.f32 1.0, %v855
      %v857 = vrcp.pop %v831
      %v858 = vmul.f32 1.0, %v857
      %v859 = vrcp.pop %v832
      %v860 = vmul.f32 1.0, %v859
      %v861 = vrcp.pop %v833
      %v862 = vmul.f32 1.0, %v861
      %v863 = vrcp.pop %v834
      %v864 = vmul.f32 1.0, %v863
      %v865 = vrcp.pop %v835
      %v866 = vmul.f32 1.0, %v865
      %v867 = vrcp.pop %v836
      %v868 = vmul.f32 1.0, %v867
      %v885 = vlaneseq
      %v886 = vand.u32 %v885, 127
      %v887 = vlaneseq
      %v888 = vshrl.u32 %v887, 7
      %v889 = vsub.s32 %v886, %v888
      %v890 = vrot.slane %v838, %v889
      %v891 = vadd.s32 %v886, 4294967288
      %v892 = vlaneseq
      %v893 = vshrl.u32 %v892, 7
      %v894 = vsub.s32 %v891, %v893
      %v895 = vrot.slane %v840, %v894
      %vm896 = vcmask 130112
      %v897 = vsel %vm896, %v895, %v890
      %v898 = vlaneseq
      %v899 = vshrl.u32 %v898, 7
      %v900 = vsub.s32 %v886, %v899
      %v901 = vrot.slane %v842, %v900
      %v902 = vlaneseq
      %v903 = vshrl.u32 %v902, 7
      %v904 = vsub.s32 %v891, %v903
      %v905 = vrot.slane %v844, %v904
      %v906 = vsel %vm896, %v905, %v901
      %v907 = vlaneseq
      %v908 = vshrl.u32 %v907, 7
      %v909 = vsub.s32 %v886, %v908
      %v910 = vrot.slane %v846, %v909
      %v911 = vlaneseq
      %v912 = vshrl.u32 %v911, 7
      %v913 = vsub.s32 %v891, %v912
      %v914 = vrot.slane %v848, %v913
      %v915 = vsel %vm896, %v914, %v910
      %v916 = vlaneseq
      %v917 = vshrl.u32 %v916, 7
      %v918 = vsub.s32 %v886, %v917
      %v919 = vrot.slane %v850, %v918
      %v920 = vlaneseq
      %v921 = vshrl.u32 %v920, 7
      %v922 = vsub.s32 %v891, %v921
      %v923 = vrot.slane %v852, %v922
      %v924 = vsel %vm896, %v923, %v919
      %v925 = vlaneseq
      %v926 = vshrl.u32 %v925, 7
      %v927 = vsub.s32 %v886, %v926
      %v928 = vrot.slane %v854, %v927
      %v929 = vlaneseq
      %v930 = vshrl.u32 %v929, 7
      %v931 = vsub.s32 %v891, %v930
      %v932 = vrot.slane %v856, %v931
      %v933 = vsel %vm896, %v932, %v928
      %v934 = vlaneseq
      %v935 = vshrl.u32 %v934, 7
      %v936 = vsub.s32 %v886, %v935
      %v937 = vrot.slane %v858, %v936
      %v938 = vlaneseq
      %v939 = vshrl.u32 %v938, 7
      %v940 = vsub.s32 %v891, %v939
      %v941 = vrot.slane %v860, %v940
      %v942 = vsel %vm896, %v941, %v937
      %v943 = vlaneseq
      %v944 = vshrl.u32 %v943, 7
      %v945 = vsub.s32 %v886, %v944
      %v946 = vrot.slane %v862, %v945
      %v947 = vlaneseq
      %v948 = vshrl.u32 %v947, 7
      %v949 = vsub.s32 %v891, %v948
      %v950 = vrot.slane %v864, %v949
      %v951 = vsel %vm896, %v950, %v946
      %v952 = vlaneseq
      %v953 = vshrl.u32 %v952, 7
      %v954 = vsub.s32 %v886, %v953
      %v955 = vrot.slane %v866, %v954
      %v956 = vlaneseq
      %v957 = vshrl.u32 %v956, 7
      %v958 = vsub.s32 %v891, %v957
      %v959 = vrot.slane %v868, %v958
      %v960 = vsel %vm896, %v959, %v955
      %vm961 = vcmask 1041409
      %v962 = vsel %vm961, %v906, %v897
      %vm963 = vcmask 1042434
      %v964 = vsel %vm963, %v915, %v962
      %vm965 = vcmask 1043459
      %v966 = vsel %vm965, %v924, %v964
      %vm967 = vcmask 1044484
      %v968 = vsel %vm967, %v933, %v966
      %vm969 = vcmask 1045509
      %v970 = vsel %vm969, %v942, %v968
      %vm971 = vcmask 1046534
      %v972 = vsel %vm971, %v951, %v970
      %vm973 = vcmask 1047559
      %v974 = vsel %vm973, %v960, %v972
      %vm976 = vcmask 130048
      %v977 = vsel %vm976, %v974, 0.0
      %978 = vadd.xlane.f32.xlu0 %v977
      %v979 = vpop.xlane.xlu0 %978
      %v981 = vlaneseq
      %v982 = vshrl.u32 %v981, 7
      %v983 = vsub.s32 0, %v982
      %v984 = vrot.slane %v979, %v983
      %v985 = vlaneseq
      %v986 = vshrl.u32 %v985, 7
      %v987 = vsub.s32 1, %v986
      %v988 = vrot.slane %v979, %v987
      %v989 = vlaneseq
      %v990 = vshrl.u32 %v989, 7
      %v991 = vsub.s32 2, %v990
      %v992 = vrot.slane %v979, %v991
      %v993 = vlaneseq
      %v994 = vshrl.u32 %v993, 7
      %v995 = vsub.s32 3, %v994
      %v996 = vrot.slane %v979, %v995
      %v997 = vlaneseq
      %v998 = vshrl.u32 %v997, 7
      %v999 = vsub.s32 4, %v998
      %v1000 = vrot.slane %v979, %v999
      %v1001 = vlaneseq
      %v1002 = vshrl.u32 %v1001, 7
      %v1003 = vsub.s32 5, %v1002
      %v1004 = vrot.slane %v979, %v1003
      %v1005 = vlaneseq
      %v1006 = vshrl.u32 %v1005, 7
      %v1007 = vsub.s32 6, %v1006
      %v1008 = vrot.slane %v979, %v1007
      %v1009 = vlaneseq
      %v1010 = vshrl.u32 %v1009, 7
      %v1011 = vsub.s32 7, %v1010
      %v1012 = vrot.slane %v979, %v1011
      %v1021 = vrcp.pop %v984
      %v1022 = vmul.f32 %v838, %v1021
      %v1023 = vmul.f32 %v840, %v1021
      %v1024 = vrcp.pop %v988
      %v1025 = vmul.f32 %v842, %v1024
      %v1026 = vmul.f32 %v844, %v1024
      %v1027 = vrcp.pop %v992
      %v1028 = vmul.f32 %v846, %v1027
      %v1029 = vmul.f32 %v848, %v1027
      %v1030 = vrcp.pop %v996
      %v1031 = vmul.f32 %v850, %v1030
      %v1032 = vmul.f32 %v852, %v1030
      %v1033 = vrcp.pop %v1000
      %v1034 = vmul.f32 %v854, %v1033
      %v1035 = vmul.f32 %v856, %v1033
      %v1036 = vrcp.pop %v1004
      %v1037 = vmul.f32 %v858, %v1036
      %v1038 = vmul.f32 %v860, %v1036
      %v1039 = vrcp.pop %v1008
      %v1040 = vmul.f32 %v862, %v1039
      %v1041 = vmul.f32 %v864, %v1039
      %v1042 = vrcp.pop %v1012
      %v1043 = vmul.f32 %v866, %v1042
      %v1044 = vmul.f32 %v868, %v1042
      %v1045 = vmul.f32 %v1022, 16.0
      %v1046 = vmul.f32 %v1023, 16.0
      %v1047 = vmul.f32 %v1025, 16.0
      %v1048 = vmul.f32 %v1026, 16.0
      %v1049 = vmul.f32 %v1028, 16.0
      %v1050 = vmul.f32 %v1029, 16.0
      %v1051 = vmul.f32 %v1031, 16.0
      %v1052 = vmul.f32 %v1032, 16.0
      %v1053 = vmul.f32 %v1034, 16.0
      %v1054 = vmul.f32 %v1035, 16.0
      %v1055 = vmul.f32 %v1037, 16.0
      %v1056 = vmul.f32 %v1038, 16.0
      %v1057 = vmul.f32 %v1040, 16.0
      %v1058 = vmul.f32 %v1041, 16.0
      %v1059 = vmul.f32 %v1043, 16.0
      %v1060 = vmul.f32 %v1044, 16.0
      %1077 = vset.pattern.permute.xlu0 0
      %1078 = vperm.xlu0 %1077, %v1045
      %v1079 = vpop.permute.xlu0 %1078
      %1080 = vset.pattern.permute.xlu0 0
      %1081 = vperm.xlu0 %1080, %v1046
      %v1082 = vpop.permute.xlu0 %1081
      %1083 = vset.pattern.permute.xlu0 0
      %1084 = vperm.xlu0 %1083, %v1047
      %v1085 = vpop.permute.xlu0 %1084
      %1086 = vset.pattern.permute.xlu0 0
      %1087 = vperm.xlu0 %1086, %v1048
      %v1088 = vpop.permute.xlu0 %1087
      %1089 = vset.pattern.permute.xlu0 0
      %1090 = vperm.xlu0 %1089, %v1049
      %v1091 = vpop.permute.xlu0 %1090
      %1092 = vset.pattern.permute.xlu0 0
      %1093 = vperm.xlu0 %1092, %v1050
      %v1094 = vpop.permute.xlu0 %1093
      %1095 = vset.pattern.permute.xlu0 0
      %1096 = vperm.xlu0 %1095, %v1051
      %v1097 = vpop.permute.xlu0 %1096
      %1098 = vset.pattern.permute.xlu0 0
      %1099 = vperm.xlu0 %1098, %v1052
      %v1100 = vpop.permute.xlu0 %1099
      %1101 = vset.pattern.permute.xlu0 0
      %1102 = vperm.xlu0 %1101, %v1053
      %v1103 = vpop.permute.xlu0 %1102
      %1104 = vset.pattern.permute.xlu0 0
      %1105 = vperm.xlu0 %1104, %v1054
      %v1106 = vpop.permute.xlu0 %1105
      %1107 = vset.pattern.permute.xlu0 0
      %1108 = vperm.xlu0 %1107, %v1055
      %v1109 = vpop.permute.xlu0 %1108
      %1110 = vset.pattern.permute.xlu0 0
      %1111 = vperm.xlu0 %1110, %v1056
      %v1112 = vpop.permute.xlu0 %1111
      %1113 = vset.pattern.permute.xlu0 0
      %1114 = vperm.xlu0 %1113, %v1057
      %v1115 = vpop.permute.xlu0 %1114
      %1116 = vset.pattern.permute.xlu0 0
      %1117 = vperm.xlu0 %1116, %v1058
      %v1118 = vpop.permute.xlu0 %1117
      %1119 = vset.pattern.permute.xlu0 0
      %1120 = vperm.xlu0 %1119, %v1059
      %v1121 = vpop.permute.xlu0 %1120
      %1122 = vset.pattern.permute.xlu0 0
      %1123 = vperm.xlu0 %1122, %v1060
      %v1124 = vpop.permute.xlu0 %1123
      %v1125 = vlaneseq
      %v1126 = vshrl.u32 %v1125, 7
      %v1127 = vsub.s32 %v886, %v1126
      %v1128 = vrot.slane %v1079, %v1127
      %v1129 = vlaneseq
      %v1130 = vshrl.u32 %v1129, 7
      %v1131 = vsub.s32 %v891, %v1130
      %v1132 = vrot.slane %v1082, %v1131
      %v1133 = vsel %vm896, %v1132, %v1128
      %v1134 = vlaneseq
      %v1135 = vshrl.u32 %v1134, 7
      %v1136 = vsub.s32 %v886, %v1135
      %v1137 = vrot.slane %v1085, %v1136
      %v1138 = vlaneseq
      %v1139 = vshrl.u32 %v1138, 7
      %v1140 = vsub.s32 %v891, %v1139
      %v1141 = vrot.slane %v1088, %v1140
      %v1142 = vsel %vm896, %v1141, %v1137
      %v1143 = vlaneseq
      %v1144 = vshrl.u32 %v1143, 7
      %v1145 = vsub.s32 %v886, %v1144
      %v1146 = vrot.slane %v1091, %v1145
      %v1147 = vlaneseq
      %v1148 = vshrl.u32 %v1147, 7
      %v1149 = vsub.s32 %v891, %v1148
      %v1150 = vrot.slane %v1094, %v1149
      %v1151 = vsel %vm896, %v1150, %v1146
      %v1152 = vlaneseq
      %v1153 = vshrl.u32 %v1152, 7
      %v1154 = vsub.s32 %v886, %v1153
      %v1155 = vrot.slane %v1097, %v1154
      %v1156 = vlaneseq
      %v1157 = vshrl.u32 %v1156, 7
      %v1158 = vsub.s32 %v891, %v1157
      %v1159 = vrot.slane %v1100, %v1158
      %v1160 = vsel %vm896, %v1159, %v1155
      %v1161 = vlaneseq
      %v1162 = vshrl.u32 %v1161, 7
      %v1163 = vsub.s32 %v886, %v1162
      %v1164 = vrot.slane %v1103, %v1163
      %v1165 = vlaneseq
      %v1166 = vshrl.u32 %v1165, 7
      %v1167 = vsub.s32 %v891, %v1166
      %v1168 = vrot.slane %v1106, %v1167
      %v1169 = vsel %vm896, %v1168, %v1164
      %v1170 = vlaneseq
      %v1171 = vshrl.u32 %v1170, 7
      %v1172 = vsub.s32 %v886, %v1171
      %v1173 = vrot.slane %v1109, %v1172
      %v1174 = vlaneseq
      %v1175 = vshrl.u32 %v1174, 7
      %v1176 = vsub.s32 %v891, %v1175
      %v1177 = vrot.slane %v1112, %v1176
      %v1178 = vsel %vm896, %v1177, %v1173
      %v1179 = vlaneseq
      %v1180 = vshrl.u32 %v1179, 7
      %v1181 = vsub.s32 %v886, %v1180
      %v1182 = vrot.slane %v1115, %v1181
      %v1183 = vlaneseq
      %v1184 = vshrl.u32 %v1183, 7
      %v1185 = vsub.s32 %v891, %v1184
      %v1186 = vrot.slane %v1118, %v1185
      %v1187 = vsel %vm896, %v1186, %v1182
      %v1188 = vlaneseq
      %v1189 = vshrl.u32 %v1188, 7
      %v1190 = vsub.s32 %v886, %v1189
      %v1191 = vrot.slane %v1121, %v1190
      %v1192 = vlaneseq
      %v1193 = vshrl.u32 %v1192, 7
      %v1194 = vsub.s32 %v891, %v1193
      %v1195 = vrot.slane %v1124, %v1194
      %v1196 = vsel %vm896, %v1195, %v1191
      %v1197 = vsel %vm961, %v1142, %v1133
      %v1198 = vsel %vm963, %v1151, %v1197
      %v1199 = vsel %vm965, %v1160, %v1198
      %v1200 = vsel %vm967, %v1169, %v1199
      %v1201 = vsel %vm969, %v1178, %v1200
      %v1202 = vsel %vm971, %v1187, %v1201
      %v1203 = vsel %vm973, %v1196, %v1202
      %v1205 = vsel %vm976, %v1203, -inf
      %1206 = vmax.xlane.f32.xlu0 %v1205
      %v1207 = vpop.xlane.xlu0 %1206
      %vm1208 = vcmp.ge.f32.partialorder %v1207, 1.0
      %v1210 = vlaneseq
      %v1211 = vshrl.u32 %v1210, 7
      %v1212 = vsub.s32 0, %v1211
      %v1213 = vrot.slane %v1207, %v1212
      %v1214 = vlaneseq
      %v1215 = vshrl.u32 %v1214, 7
      %v1216 = vsub.s32 1, %v1215
      %v1217 = vrot.slane %v1207, %v1216
      %v1218 = vlaneseq
      %v1219 = vshrl.u32 %v1218, 7
      %v1220 = vsub.s32 2, %v1219
      %v1221 = vrot.slane %v1207, %v1220
      %v1222 = vlaneseq
      %v1223 = vshrl.u32 %v1222, 7
      %v1224 = vsub.s32 3, %v1223
      %v1225 = vrot.slane %v1207, %v1224
      %v1226 = vlaneseq
      %v1227 = vshrl.u32 %v1226, 7
      %v1228 = vsub.s32 4, %v1227
      %v1229 = vrot.slane %v1207, %v1228
      %v1230 = vlaneseq
      %v1231 = vshrl.u32 %v1230, 7
      %v1232 = vsub.s32 5, %v1231
      %v1233 = vrot.slane %v1207, %v1232
      %v1234 = vlaneseq
      %v1235 = vshrl.u32 %v1234, 7
      %v1236 = vsub.s32 6, %v1235
      %v1237 = vrot.slane %v1207, %v1236
      %v1238 = vlaneseq
      %v1239 = vshrl.u32 %v1238, 7
      %v1240 = vsub.s32 7, %v1239
      %v1241 = vrot.slane %v1207, %v1240
      %v1250 = vrcp.pop %v1213
      %v1251 = vmul.f32 %v1045, %v1250
      %v1252 = vmul.f32 %v1046, %v1250
      %v1253 = vrcp.pop %v1217
      %v1254 = vmul.f32 %v1047, %v1253
      %v1255 = vmul.f32 %v1048, %v1253
      %v1256 = vrcp.pop %v1221
      %v1257 = vmul.f32 %v1049, %v1256
      %v1258 = vmul.f32 %v1050, %v1256
      %v1259 = vrcp.pop %v1225
      %v1260 = vmul.f32 %v1051, %v1259
      %v1261 = vmul.f32 %v1052, %v1259
      %v1262 = vrcp.pop %v1229
      %v1263 = vmul.f32 %v1053, %v1262
      %v1264 = vmul.f32 %v1054, %v1262
      %v1265 = vrcp.pop %v1233
      %v1266 = vmul.f32 %v1055, %v1265
      %v1267 = vmul.f32 %v1056, %v1265
      %v1268 = vrcp.pop %v1237
      %v1269 = vmul.f32 %v1057, %v1268
      %v1270 = vmul.f32 %v1058, %v1268
      %v1271 = vrcp.pop %v1241
      %v1272 = vmul.f32 %v1059, %v1271
      %v1273 = vmul.f32 %v1060, %v1271
      %v1274 = vsel %vm1208, 1, 0
      %vm1275 = vcmp.eq.s32.totalorder %v1274, 1
      %1292 = vset.pattern.permute.xlu0 0
      %1293 = vperm.xlu0 %1292, %v1251
      %v1294 = vpop.permute.xlu0 %1293
      %1295 = vset.pattern.permute.xlu0 0
      %1296 = vperm.xlu0 %1295, %v1252
      %v1297 = vpop.permute.xlu0 %1296
      %1298 = vset.pattern.permute.xlu0 0
      %1299 = vperm.xlu0 %1298, %v1254
      %v1300 = vpop.permute.xlu0 %1299
      %1301 = vset.pattern.permute.xlu0 0
      %1302 = vperm.xlu0 %1301, %v1255
      %v1303 = vpop.permute.xlu0 %1302
      %1304 = vset.pattern.permute.xlu0 0
      %1305 = vperm.xlu0 %1304, %v1257
      %v1306 = vpop.permute.xlu0 %1305
      %1307 = vset.pattern.permute.xlu0 0
      %1308 = vperm.xlu0 %1307, %v1258
      %v1309 = vpop.permute.xlu0 %1308
      %1310 = vset.pattern.permute.xlu0 0
      %1311 = vperm.xlu0 %1310, %v1260
      %v1312 = vpop.permute.xlu0 %1311
      %1313 = vset.pattern.permute.xlu0 0
      %1314 = vperm.xlu0 %1313, %v1261
      %v1315 = vpop.permute.xlu0 %1314
      %1316 = vset.pattern.permute.xlu0 0
      %1317 = vperm.xlu0 %1316, %v1263
      %v1318 = vpop.permute.xlu0 %1317
      %1319 = vset.pattern.permute.xlu0 0
      %1320 = vperm.xlu0 %1319, %v1264
      %v1321 = vpop.permute.xlu0 %1320
      %1322 = vset.pattern.permute.xlu0 0
      %1323 = vperm.xlu0 %1322, %v1266
      %v1324 = vpop.permute.xlu0 %1323
      %1325 = vset.pattern.permute.xlu0 0
      %1326 = vperm.xlu0 %1325, %v1267
      %v1327 = vpop.permute.xlu0 %1326
      %1328 = vset.pattern.permute.xlu0 0
      %1329 = vperm.xlu0 %1328, %v1269
      %v1330 = vpop.permute.xlu0 %1329
      %1331 = vset.pattern.permute.xlu0 0
      %1332 = vperm.xlu0 %1331, %v1270
      %v1333 = vpop.permute.xlu0 %1332
      %1334 = vset.pattern.permute.xlu0 0
      %1335 = vperm.xlu0 %1334, %v1272
      %v1336 = vpop.permute.xlu0 %1335
      %1337 = vset.pattern.permute.xlu0 0
      %1338 = vperm.xlu0 %1337, %v1273
      %v1339 = vpop.permute.xlu0 %1338
      %v1340 = vlaneseq
      %v1341 = vshrl.u32 %v1340, 7
      %v1342 = vsub.s32 %v886, %v1341
      %v1343 = vrot.slane %v1294, %v1342
      %v1344 = vlaneseq
      %v1345 = vshrl.u32 %v1344, 7
      %v1346 = vsub.s32 %v891, %v1345
      %v1347 = vrot.slane %v1297, %v1346
      %v1348 = vsel %vm896, %v1347, %v1343
      %v1349 = vlaneseq
      %v1350 = vshrl.u32 %v1349, 7
      %v1351 = vsub.s32 %v886, %v1350
      %v1352 = vrot.slane %v1300, %v1351
      %v1353 = vlaneseq
      %v1354 = vshrl.u32 %v1353, 7
      %v1355 = vsub.s32 %v891, %v1354
      %v1356 = vrot.slane %v1303, %v1355
      %v1357 = vsel %vm896, %v1356, %v1352
      %v1358 = vlaneseq
      %v1359 = vshrl.u32 %v1358, 7
      %v1360 = vsub.s32 %v886, %v1359
      %v1361 = vrot.slane %v1306, %v1360
      %v1362 = vlaneseq
      %v1363 = vshrl.u32 %v1362, 7
      %v1364 = vsub.s32 %v891, %v1363
      %v1365 = vrot.slane %v1309, %v1364
      %v1366 = vsel %vm896, %v1365, %v1361
      %v1367 = vlaneseq
      %v1368 = vshrl.u32 %v1367, 7
      %v1369 = vsub.s32 %v886, %v1368
      %v1370 = vrot.slane %v1312, %v1369
      %v1371 = vlaneseq
      %v1372 = vshrl.u32 %v1371, 7
      %v1373 = vsub.s32 %v891, %v1372
      %v1374 = vrot.slane %v1315, %v1373
      %v1375 = vsel %vm896, %v1374, %v1370
      %v1376 = vlaneseq
      %v1377 = vshrl.u32 %v1376, 7
      %v1378 = vsub.s32 %v886, %v1377
      %v1379 = vrot.slane %v1318, %v1378
      %v1380 = vlaneseq
      %v1381 = vshrl.u32 %v1380, 7
      %v1382 = vsub.s32 %v891, %v1381
      %v1383 = vrot.slane %v1321, %v1382
      %v1384 = vsel %vm896, %v1383, %v1379
      %v1385 = vlaneseq
      %v1386 = vshrl.u32 %v1385, 7
      %v1387 = vsub.s32 %v886, %v1386
      %v1388 = vrot.slane %v1324, %v1387
      %v1389 = vlaneseq
      %v1390 = vshrl.u32 %v1389, 7
      %v1391 = vsub.s32 %v891, %v1390
      %v1392 = vrot.slane %v1327, %v1391
      %v1393 = vsel %vm896, %v1392, %v1388
      %v1394 = vlaneseq
      %v1395 = vshrl.u32 %v1394, 7
      %v1396 = vsub.s32 %v886, %v1395
      %v1397 = vrot.slane %v1330, %v1396
      %v1398 = vlaneseq
      %v1399 = vshrl.u32 %v1398, 7
      %v1400 = vsub.s32 %v891, %v1399
      %v1401 = vrot.slane %v1333, %v1400
      %v1402 = vsel %vm896, %v1401, %v1397
      %v1403 = vlaneseq
      %v1404 = vshrl.u32 %v1403, 7
      %v1405 = vsub.s32 %v886, %v1404
      %v1406 = vrot.slane %v1336, %v1405
      %v1407 = vlaneseq
      %v1408 = vshrl.u32 %v1407, 7
      %v1409 = vsub.s32 %v891, %v1408
      %v1410 = vrot.slane %v1339, %v1409
      %v1411 = vsel %vm896, %v1410, %v1406
      %v1412 = vsel %vm961, %v1357, %v1348
      %v1413 = vsel %vm963, %v1366, %v1412
      %v1414 = vsel %vm965, %v1375, %v1413
      %v1415 = vsel %vm967, %v1384, %v1414
      %v1416 = vsel %vm969, %v1393, %v1415
      %v1417 = vsel %vm971, %v1402, %v1416
      %v1418 = vsel %vm973, %v1411, %v1417
      %v1420 = vsel %vm1275, %v1418, %v1203
      %v1421 = vsel %vm976, %v1420, 0.0
      %1422 = vadd.xlane.f32.xlu0 %v1421
      %v1423 = vpop.xlane.xlu0 %1422
      %v1424 = vsub.f32 16.0, %v1423
      %vm1425 = vcmp.lt.f32.partialorder %v1420, 0.9999
      %vm1426 = vcmp.gt.f32.partialorder %v1420, 0.0001
      %vm1427 = vmand %vm1425, %vm1426
      %v1428 = vsub.f32 1.0, %v1420
      %v1429 = vsel %vm1427, %v1428, 0.0
      %v1430 = vsel %vm976, %v1429, 0.0
      %1431 = vadd.xlane.f32.xlu0 %v1430
      %v1432 = vpop.xlane.xlu0 %1431
      %v1433 = vrcp.pop %v1432
      %v1434 = vmul.f32 %v1424, %v1433
      %v1435 = vmin.f32 %v1434, 1.0
      %vm1436 = vcmp.ge.f32.partialorder %v1424, 1.0
      %v1437 = vsel %vm1436, 1, 0
      %vm1438 = vcmp.eq.s32.totalorder %v1437, 1
      %vm1439 = vmand %vm1438, %vm1427
      %v1440 = vmul.f32 %v1429, %v1435
      %v1441 = vadd.f32 %v1420, %v1440
      %v1442 = vsel %vm1439, %v1441, %v1420
      %v1443 = vlaneseq
      %v1444 = vshrl.u32 %v1443, 7
      %v1445 = vsub.s32 0, %v1444
      %v1446 = vrot.slane %v1442, %v1445
      %1448 = vbcast.lane.b32.xlu0 %v1446, 256
      %v1449 = vpop.permute.xlu0 %1448
      %s1451 = sor.u32 256, 8
      %1452 = vbcast.lane.b32.xlu0 %v1446, %s1451
      %v1453 = vpop.permute.xlu0 %1452
      %v1454 = vlaneseq
      %v1455 = vshrl.u32 %v1454, 7
      %v1456 = vsub.s32 1, %v1455
      %v1457 = vrot.slane %v1442, %v1456
      %1459 = vbcast.lane.b32.xlu0 %v1457, 256
      %v1460 = vpop.permute.xlu0 %1459
      %s1462 = sor.u32 256, 8
      %1463 = vbcast.lane.b32.xlu0 %v1457, %s1462
      %v1464 = vpop.permute.xlu0 %1463
      %v1465 = vlaneseq
      %v1466 = vshrl.u32 %v1465, 7
      %v1467 = vsub.s32 2, %v1466
      %v1468 = vrot.slane %v1442, %v1467
      %1470 = vbcast.lane.b32.xlu0 %v1468, 256
      %v1471 = vpop.permute.xlu0 %1470
      %s1473 = sor.u32 256, 8
      %1474 = vbcast.lane.b32.xlu0 %v1468, %s1473
      %v1475 = vpop.permute.xlu0 %1474
      %v1476 = vlaneseq
      %v1477 = vshrl.u32 %v1476, 7
      %v1478 = vsub.s32 3, %v1477
      %v1479 = vrot.slane %v1442, %v1478
      %1481 = vbcast.lane.b32.xlu0 %v1479, 256
      %v1482 = vpop.permute.xlu0 %1481
      %s1484 = sor.u32 256, 8
      %1485 = vbcast.lane.b32.xlu0 %v1479, %s1484
      %v1486 = vpop.permute.xlu0 %1485
      %v1487 = vlaneseq
      %v1488 = vshrl.u32 %v1487, 7
      %v1489 = vsub.s32 4, %v1488
      %v1490 = vrot.slane %v1442, %v1489
      %1492 = vbcast.lane.b32.xlu0 %v1490, 256
      %v1493 = vpop.permute.xlu0 %1492
      %s1495 = sor.u32 256, 8
      %1496 = vbcast.lane.b32.xlu0 %v1490, %s1495
      %v1497 = vpop.permute.xlu0 %1496
      %v1498 = vlaneseq
      %v1499 = vshrl.u32 %v1498, 7
      %v1500 = vsub.s32 5, %v1499
      %v1501 = vrot.slane %v1442, %v1500
      %1503 = vbcast.lane.b32.xlu0 %v1501, 256
      %v1504 = vpop.permute.xlu0 %1503
      %s1506 = sor.u32 256, 8
      %1507 = vbcast.lane.b32.xlu0 %v1501, %s1506
      %v1508 = vpop.permute.xlu0 %1507
      %v1509 = vlaneseq
      %v1510 = vshrl.u32 %v1509, 7
      %v1511 = vsub.s32 6, %v1510
      %v1512 = vrot.slane %v1442, %v1511
      %1514 = vbcast.lane.b32.xlu0 %v1512, 256
      %v1515 = vpop.permute.xlu0 %1514
      %s1517 = sor.u32 256, 8
      %1518 = vbcast.lane.b32.xlu0 %v1512, %s1517
      %v1519 = vpop.permute.xlu0 %1518
      %v1520 = vlaneseq
      %v1521 = vshrl.u32 %v1520, 7
      %v1522 = vsub.s32 7, %v1521
      %v1523 = vrot.slane %v1442, %v1522
      %1525 = vbcast.lane.b32.xlu0 %v1523, 256
      %v1526 = vpop.permute.xlu0 %1525
      %s1528 = sor.u32 256, 8
      %1529 = vbcast.lane.b32.xlu0 %v1523, %s1528
      %v1530 = vpop.permute.xlu0 %1529
      %v1531 = vld [vmem:[%s4] sm:$0x1]
      %v1533 = vlaneseq
      %v1534 = vshrl.u32 %v1533, 7
      %v1535 = vsub.s32 0, %v1534
      %v1536 = vrot.slane %v1531, %v1535
      %v1538 = vsub.f32 %v1449, %v1536
      %v1539 = vsub.f32 %v1453, %v1536
      %v1540 = vsub.f32 %v1460, %v1536
      %v1541 = vsub.f32 %v1464, %v1536
      %v1542 = vsub.f32 %v1471, %v1536
      %v1543 = vsub.f32 %v1475, %v1536
      %v1544 = vsub.f32 %v1482, %v1536
      %v1545 = vsub.f32 %v1486, %v1536
      %v1546 = vsub.f32 %v1493, %v1536
      %v1547 = vsub.f32 %v1497, %v1536
      %v1548 = vsub.f32 %v1504, %v1536
      %v1549 = vsub.f32 %v1508, %v1536
      %v1550 = vsub.f32 %v1515, %v1536
      %v1551 = vsub.f32 %v1519, %v1536
      %v1552 = vsub.f32 %v1526, %v1536
      %v1553 = vsub.f32 %v1530, %v1536
      %v1554 = vand.u32 2147483647, %v1538
      %v1555 = vand.u32 2147483647, %v1539
      %v1556 = vand.u32 2147483647, %v1540
      %v1557 = vand.u32 2147483647, %v1541
      %v1558 = vand.u32 2147483647, %v1542
      %v1559 = vand.u32 2147483647, %v1543
      %v1560 = vand.u32 2147483647, %v1544
      %v1561 = vand.u32 2147483647, %v1545
      %v1562 = vand.u32 2147483647, %v1546
      %v1563 = vand.u32 2147483647, %v1547
      %v1564 = vand.u32 2147483647, %v1548
      %v1565 = vand.u32 2147483647, %v1549
      %v1566 = vand.u32 2147483647, %v1550
      %v1567 = vand.u32 2147483647, %v1551
      %v1568 = vand.u32 2147483647, %v1552
      %v1569 = vand.u32 2147483647, %v1553
      %v1570 = vsel %vm976, %v1554, inf
      %1571 = vmin.xlane.f32.xlu0 %v1570
      %v1572 = vpop.xlane.xlu0 %1571
      %v1573 = vsel %vm976, %v1555, inf
      %1574 = vmin.xlane.f32.xlu0 %v1573
      %v1575 = vpop.xlane.xlu0 %1574
      %v1576 = vsel %vm976, %v1556, inf
      %1577 = vmin.xlane.f32.xlu0 %v1576
      %v1578 = vpop.xlane.xlu0 %1577
      %v1579 = vsel %vm976, %v1557, inf
      %1580 = vmin.xlane.f32.xlu0 %v1579
      %v1581 = vpop.xlane.xlu0 %1580
      %v1582 = vsel %vm976, %v1558, inf
      %1583 = vmin.xlane.f32.xlu0 %v1582
      %v1584 = vpop.xlane.xlu0 %1583
      %v1585 = vsel %vm976, %v1559, inf
      %1586 = vmin.xlane.f32.xlu0 %v1585
      %v1587 = vpop.xlane.xlu0 %1586
      %v1588 = vsel %vm976, %v1560, inf
      %1589 = vmin.xlane.f32.xlu0 %v1588
      %v1590 = vpop.xlane.xlu0 %1589
      %v1591 = vsel %vm976, %v1561, inf
      %1592 = vmin.xlane.f32.xlu0 %v1591
      %v1593 = vpop.xlane.xlu0 %1592
      %v1594 = vsel %vm976, %v1562, inf
      %1595 = vmin.xlane.f32.xlu0 %v1594
      %v1596 = vpop.xlane.xlu0 %1595
      %v1597 = vsel %vm976, %v1563, inf
      %1598 = vmin.xlane.f32.xlu0 %v1597
      %v1599 = vpop.xlane.xlu0 %1598
      %v1600 = vsel %vm976, %v1564, inf
      %1601 = vmin.xlane.f32.xlu0 %v1600
      %v1602 = vpop.xlane.xlu0 %1601
      %v1603 = vsel %vm976, %v1565, inf
      %1604 = vmin.xlane.f32.xlu0 %v1603
      %v1605 = vpop.xlane.xlu0 %1604
      %v1606 = vsel %vm976, %v1566, inf
      %1607 = vmin.xlane.f32.xlu0 %v1606
      %v1608 = vpop.xlane.xlu0 %1607
      %v1609 = vsel %vm976, %v1567, inf
      %1610 = vmin.xlane.f32.xlu0 %v1609
      %v1611 = vpop.xlane.xlu0 %1610
      %v1612 = vsel %vm976, %v1568, inf
      %1613 = vmin.xlane.f32.xlu0 %v1612
      %v1614 = vpop.xlane.xlu0 %1613
      %v1615 = vsel %vm976, %v1569, inf
      %1616 = vmin.xlane.f32.xlu0 %v1615
      %v1617 = vpop.xlane.xlu0 %1616
      %v1618 = vsub.f32 %v1554, %v1572
      %v1619 = vsub.f32 %v1555, %v1575
      %v1620 = vsub.f32 %v1556, %v1578
      %v1621 = vsub.f32 %v1557, %v1581
      %v1622 = vsub.f32 %v1558, %v1584
      %v1623 = vsub.f32 %v1559, %v1587
      %v1624 = vsub.f32 %v1560, %v1590
      %v1625 = vsub.f32 %v1561, %v1593
      %v1626 = vsub.f32 %v1562, %v1596
      %v1627 = vsub.f32 %v1563, %v1599
      %v1628 = vsub.f32 %v1564, %v1602
      %v1629 = vsub.f32 %v1565, %v1605
      %v1630 = vsub.f32 %v1566, %v1608
      %v1631 = vsub.f32 %v1567, %v1611
      %v1632 = vsub.f32 %v1568, %v1614
      %v1633 = vsub.f32 %v1569, %v1617
      %v1634 = vsub.f32 0.0, %v1618
      %v1635 = vsub.f32 0.0, %v1619
      %v1636 = vsub.f32 0.0, %v1620
      %v1637 = vsub.f32 0.0, %v1621
      %v1638 = vsub.f32 0.0, %v1622
      %v1639 = vsub.f32 0.0, %v1623
      %v1640 = vsub.f32 0.0, %v1624
      %v1641 = vsub.f32 0.0, %v1625
      %v1642 = vsub.f32 0.0, %v1626
      %v1643 = vsub.f32 0.0, %v1627
      %v1644 = vsub.f32 0.0, %v1628
      %v1645 = vsub.f32 0.0, %v1629
      %v1646 = vsub.f32 0.0, %v1630
      %v1647 = vsub.f32 0.0, %v1631
      %v1648 = vsub.f32 0.0, %v1632
      %v1649 = vsub.f32 0.0, %v1633
      %v1650 = vmul.f32 %v1634, 1.442695
      %v1651 = vpow.pop %v1650
      %v1652 = vmul.f32 %v1635, 1.442695
      %v1653 = vpow.pop %v1652
      %v1654 = vmul.f32 %v1636, 1.442695
      %v1655 = vpow.pop %v1654
      %v1656 = vmul.f32 %v1637, 1.442695
      %v1657 = vpow.pop %v1656
      %v1658 = vmul.f32 %v1638, 1.442695
      %v1659 = vpow.pop %v1658
      %v1660 = vmul.f32 %v1639, 1.442695
      %v1661 = vpow.pop %v1660
      %v1662 = vmul.f32 %v1640, 1.442695
      %v1663 = vpow.pop %v1662
      %v1664 = vmul.f32 %v1641, 1.442695
      %v1665 = vpow.pop %v1664
      %v1666 = vmul.f32 %v1642, 1.442695
      %v1667 = vpow.pop %v1666
      %v1668 = vmul.f32 %v1643, 1.442695
      %v1669 = vpow.pop %v1668
      %v1670 = vmul.f32 %v1644, 1.442695
      %v1671 = vpow.pop %v1670
      %v1672 = vmul.f32 %v1645, 1.442695
      %v1673 = vpow.pop %v1672
      %v1674 = vmul.f32 %v1646, 1.442695
      %v1675 = vpow.pop %v1674
      %v1676 = vmul.f32 %v1647, 1.442695
      %v1677 = vpow.pop %v1676
      %v1678 = vmul.f32 %v1648, 1.442695
      %v1679 = vpow.pop %v1678
      %v1680 = vmul.f32 %v1649, 1.442695
      %v1681 = vpow.pop %v1680
      %v1682 = vsel %vm976, %v1651, 0.0
      %1683 = vadd.xlane.f32.xlu0 %v1682
      %v1684 = vpop.xlane.xlu0 %1683
      %v1685 = vsel %vm976, %v1653, 0.0
      %1686 = vadd.xlane.f32.xlu0 %v1685
      %v1687 = vpop.xlane.xlu0 %1686
      %v1688 = vsel %vm976, %v1655, 0.0
      %1689 = vadd.xlane.f32.xlu0 %v1688
      %v1690 = vpop.xlane.xlu0 %1689
      %v1691 = vsel %vm976, %v1657, 0.0
      %1692 = vadd.xlane.f32.xlu0 %v1691
      %v1693 = vpop.xlane.xlu0 %1692
      %v1694 = vsel %vm976, %v1659, 0.0
      %1695 = vadd.xlane.f32.xlu0 %v1694
      %v1696 = vpop.xlane.xlu0 %1695
      %v1697 = vsel %vm976, %v1661, 0.0
      %1698 = vadd.xlane.f32.xlu0 %v1697
      %v1699 = vpop.xlane.xlu0 %1698
      %v1700 = vsel %vm976, %v1663, 0.0
      %1701 = vadd.xlane.f32.xlu0 %v1700
      %v1702 = vpop.xlane.xlu0 %1701
      %v1703 = vsel %vm976, %v1665, 0.0
      %1704 = vadd.xlane.f32.xlu0 %v1703
      %v1705 = vpop.xlane.xlu0 %1704
      %v1706 = vsel %vm976, %v1667, 0.0
      %1707 = vadd.xlane.f32.xlu0 %v1706
      %v1708 = vpop.xlane.xlu0 %1707
      %v1709 = vsel %vm976, %v1669, 0.0
      %1710 = vadd.xlane.f32.xlu0 %v1709
      %v1711 = vpop.xlane.xlu0 %1710
      %v1712 = vsel %vm976, %v1671, 0.0
      %1713 = vadd.xlane.f32.xlu0 %v1712
      %v1714 = vpop.xlane.xlu0 %1713
      %v1715 = vsel %vm976, %v1673, 0.0
      %1716 = vadd.xlane.f32.xlu0 %v1715
      %v1717 = vpop.xlane.xlu0 %1716
      %v1718 = vsel %vm976, %v1675, 0.0
      %1719 = vadd.xlane.f32.xlu0 %v1718
      %v1720 = vpop.xlane.xlu0 %1719
      %v1721 = vsel %vm976, %v1677, 0.0
      %1722 = vadd.xlane.f32.xlu0 %v1721
      %v1723 = vpop.xlane.xlu0 %1722
      %v1724 = vsel %vm976, %v1679, 0.0
      %1725 = vadd.xlane.f32.xlu0 %v1724
      %v1726 = vpop.xlane.xlu0 %1725
      %v1727 = vsel %vm976, %v1681, 0.0
      %1728 = vadd.xlane.f32.xlu0 %v1727
      %v1729 = vpop.xlane.xlu0 %1728
      %v1730 = vrcp.pop %v1684
      %v1731 = vmul.f32 %v1651, %v1730
      %v1732 = vrcp.pop %v1687
      %v1733 = vmul.f32 %v1653, %v1732
      %v1734 = vrcp.pop %v1690
      %v1735 = vmul.f32 %v1655, %v1734
      %v1736 = vrcp.pop %v1693
      %v1737 = vmul.f32 %v1657, %v1736
      %v1738 = vrcp.pop %v1696
      %v1739 = vmul.f32 %v1659, %v1738
      %v1740 = vrcp.pop %v1699
      %v1741 = vmul.f32 %v1661, %v1740
      %v1742 = vrcp.pop %v1702
      %v1743 = vmul.f32 %v1663, %v1742
      %v1744 = vrcp.pop %v1705
      %v1745 = vmul.f32 %v1665, %v1744
      %v1746 = vrcp.pop %v1708
      %v1747 = vmul.f32 %v1667, %v1746
      %v1748 = vrcp.pop %v1711
      %v1749 = vmul.f32 %v1669, %v1748
      %v1750 = vrcp.pop %v1714
      %v1751 = vmul.f32 %v1671, %v1750
      %v1752 = vrcp.pop %v1717
      %v1753 = vmul.f32 %v1673, %v1752
      %v1754 = vrcp.pop %v1720
      %v1755 = vmul.f32 %v1675, %v1754
      %v1756 = vrcp.pop %v1723
      %v1757 = vmul.f32 %v1677, %v1756
      %v1758 = vrcp.pop %v1726
      %v1759 = vmul.f32 %v1679, %v1758
      %v1760 = vrcp.pop %v1729
      %v1761 = vmul.f32 %v1681, %v1760
      %v1762 = vmul.f32 %v248, 1.442695
      %v1763 = vpow.pop %v1762
      %v1764 = vmul.f32 %v249, 1.442695
      %v1765 = vpow.pop %v1764
      %v1766 = vmul.f32 %v250, 1.442695
      %v1767 = vpow.pop %v1766
      %v1768 = vmul.f32 %v251, 1.442695
      %v1769 = vpow.pop %v1768
      %v1770 = vmul.f32 %v252, 1.442695
      %v1771 = vpow.pop %v1770
      %v1772 = vmul.f32 %v253, 1.442695
      %v1773 = vpow.pop %v1772
      %v1774 = vmul.f32 %v254, 1.442695
      %v1775 = vpow.pop %v1774
      %v1776 = vmul.f32 %v255, 1.442695
      %v1777 = vpow.pop %v1776
      %v1778 = vmul.f32 %v256, 1.442695
      %v1779 = vpow.pop %v1778
      %v1780 = vmul.f32 %v257, 1.442695
      %v1781 = vpow.pop %v1780
      %v1782 = vmul.f32 %v258, 1.442695
      %v1783 = vpow.pop %v1782
      %v1784 = vmul.f32 %v259, 1.442695
      %v1785 = vpow.pop %v1784
      %v1786 = vmul.f32 %v260, 1.442695
      %v1787 = vpow.pop %v1786
      %v1788 = vmul.f32 %v261, 1.442695
      %v1789 = vpow.pop %v1788
      %v1790 = vmul.f32 %v262, 1.442695
      %v1791 = vpow.pop %v1790
      %v1792 = vmul.f32 %v263, 1.442695
      %v1793 = vpow.pop %v1792
      %v1795 = vsel %vm976, %v1731, 0
      %v1798 = vsel %vm976, %v1733, 0
      %1800 = vmatprep.subr.mxu0 0.0
      %1801 = vmatpush1.msra.mxu0 %v1763
      %1802 = vmatprep.subr.mxu0 0.0
      %1803 = vmatpush1.msra.mxu0 %v1765
      %1804 = vmatprep.subr.mxu0 0.0
      %1805 = vmatpush1.msra.mxu0 0.0
      %1806 = vmatprep.subr.mxu0 0.0
      %1807 = vmatpush1.msra.mxu0 0.0
      %1808 = vmatprep.subr.mxu0 0.0
      %1809 = vmatpush1.msra.mxu0 0.0
      %1810 = vmatprep.subr.mxu0 0.0
      %1811 = vmatpush1.msra.mxu0 0.0
      %1812 = vmatprep.subr.mxu0 0.0
      %1813 = vmatpush1.msra.mxu0 0.0
      %1814 = vmatprep.subr.mxu0 0.0
      %1815 = vmatpush1.msra.mxu0 0.0
      %1816 = vmatprep.subr.mxu0 0.0
      %1817 = vmatpush1.msra.mxu0 0.0
      %1818 = vmatprep.subr.mxu0 0.0
      %1819 = vmatpush1.msra.mxu0 0.0
      %1820 = vmatprep.subr.mxu0 0.0
      %1821 = vmatpush1.msra.mxu0 0.0
      %1822 = vmatprep.subr.mxu0 0.0
      %1823 = vmatpush1.msra.mxu0 0.0
      %1824 = vmatprep.subr.mxu0 0.0
      %1825 = vmatpush1.msra.mxu0 0.0
      %1826 = vmatprep.subr.mxu0 0.0
      %1827 = vmatpush1.msra.mxu0 0.0
      %1828 = vmatprep.subr.mxu0 0.0
      %1829 = vmatpush1.msra.mxu0 0.0
      %1830 = vmatprep.subr.mxu0 0.0
      %1831 = vmatpush1.msra.mxu0 0.0
      %1832 = vmatprep.subr.mxu0 0.0
      %1833 = vmatpush1.msra.mxu0 0.0
      %1834 = vmatprep.subr.mxu0 0.0
      %1835 = vmatpush1.msra.mxu0 0.0
      %1836 = vmatprep.subr.mxu0 0.0
      %1837 = vmatpush1.msra.mxu0 0.0
      %1838 = vmatprep.subr.mxu0 0.0
      %1839 = vmatpush1.msra.mxu0 0.0
      %1840 = vmatprep.subr.mxu0 0.0
      %1841 = vmatpush1.msra.mxu0 0.0
      %1842 = vmatprep.subr.mxu0 0.0
      %1843 = vmatpush1.msra.mxu0 0.0
      %1844 = vmatprep.subr.mxu0 0.0
      %1845 = vmatpush1.msra.mxu0 0.0
      %1846 = vmatprep.subr.mxu0 0.0
      %1847 = vmatpush1.msra.mxu0 0.0
      %1848 = vmatprep.subr.mxu0 0.0
      %1849 = vmatpush1.msra.mxu0 0.0
      %1850 = vmatprep.subr.mxu0 0.0
      %1851 = vmatpush1.msra.mxu0 0.0
      %1852 = vmatprep.subr.mxu0 0.0
      %1853 = vmatpush1.msra.mxu0 0.0
      %1854 = vmatprep.subr.mxu0 0.0
      %1855 = vmatpush1.msra.mxu0 0.0
      %1856 = vmatprep.subr.mxu0 0.0
      %1857 = vmatpush1.msra.mxu0 0.0
      %1858 = vmatprep.subr.mxu0 0.0
      %1859 = vmatpush1.msra.mxu0 0.0
      %1860 = vmatprep.subr.mxu0 0.0
      %1861 = vmatpush1.msra.mxu0 0.0
      %1862 = vmatprep.subr.mxu0 0.0
      %1863 = vmatpush1.msra.mxu0 0.0
      %1864 = vmatprep.mubr.f32.mxu0 0.0
      %1865 = vmatmul.mubr.f32.gmra.mrb[0].mxu0 %v1795
      %v1866 = vpop.f32.mrb[0].mxu0
      %v1867 = vadd.f32 1e-12, %v1866
      %v1868 = vpop.f32.mrb[0].mxu0
      %1869 = vmatprep.mubr.f32.mxu0 0.0
      %1870 = vmatmul.mubr.f32.gmra.mrb[0].mxu0 %v1798
      %v1871 = vpop.f32.mrb[0].mxu0
      %v1872 = vadd.f32 1e-12, %v1871
      %v1873 = vpop.f32.mrb[0].mxu0
      %1874 = vdwg.mxu0
      %v1876 = vsel %vm976, %v1735, 0
      %v1879 = vsel %vm976, %v1737, 0
      %1881 = vmatprep.subr.mxu0 0.0
      %1882 = vmatpush1.msra.mxu0 %v1767
      %1883 = vmatprep.subr.mxu0 0.0
      %1884 = vmatpush1.msra.mxu0 %v1769
      %1885 = vmatprep.subr.mxu0 0.0
      %1886 = vmatpush1.msra.mxu0 0.0
      %1887 = vmatprep.subr.mxu0 0.0
      %1888 = vmatpush1.msra.mxu0 0.0
      %1889 = vmatprep.subr.mxu0 0.0
      %1890 = vmatpush1.msra.mxu0 0.0
      %1891 = vmatprep.subr.mxu0 0.0
      %1892 = vmatpush1.msra.mxu0 0.0
      %1893 = vmatprep.subr.mxu0 0.0
      %1894 = vmatpush1.msra.mxu0 0.0
      %1895 = vmatprep.subr.mxu0 0.0
      %1896 = vmatpush1.msra.mxu0 0.0
      %1897 = vmatprep.subr.mxu0 0.0
      %1898 = vmatpush1.msra.mxu0 0.0
      %1899 = vmatprep.subr.mxu0 0.0
      %1900 = vmatpush1.msra.mxu0 0.0
      %1901 = vmatprep.subr.mxu0 0.0
      %1902 = vmatpush1.msra.mxu0 0.0
      %1903 = vmatprep.subr.mxu0 0.0
      %1904 = vmatpush1.msra.mxu0 0.0
      %1905 = vmatprep.subr.mxu0 0.0
      %1906 = vmatpush1.msra.mxu0 0.0
      %1907 = vmatprep.subr.mxu0 0.0
      %1908 = vmatpush1.msra.mxu0 0.0
      %1909 = vmatprep.subr.mxu0 0.0
      %1910 = vmatpush1.msra.mxu0 0.0
      %1911 = vmatprep.subr.mxu0 0.0
      %1912 = vmatpush1.msra.mxu0 0.0
      %1913 = vmatprep.subr.mxu0 0.0
      %1914 = vmatpush1.msra.mxu0 0.0
      %1915 = vmatprep.subr.mxu0 0.0
      %1916 = vmatpush1.msra.mxu0 0.0
      %1917 = vmatprep.subr.mxu0 0.0
      %1918 = vmatpush1.msra.mxu0 0.0
      %1919 = vmatprep.subr.mxu0 0.0
      %1920 = vmatpush1.msra.mxu0 0.0
      %1921 = vmatprep.subr.mxu0 0.0
      %1922 = vmatpush1.msra.mxu0 0.0
      %1923 = vmatprep.subr.mxu0 0.0
      %1924 = vmatpush1.msra.mxu0 0.0
      %1925 = vmatprep.subr.mxu0 0.0
      %1926 = vmatpush1.msra.mxu0 0.0
      %1927 = vmatprep.subr.mxu0 0.0
      %1928 = vmatpush1.msra.mxu0 0.0
      %1929 = vmatprep.subr.mxu0 0.0
      %1930 = vmatpush1.msra.mxu0 0.0
      %1931 = vmatprep.subr.mxu0 0.0
      %1932 = vmatpush1.msra.mxu0 0.0
      %1933 = vmatprep.subr.mxu0 0.0
      %1934 = vmatpush1.msra.mxu0 0.0
      %1935 = vmatprep.subr.mxu0 0.0
      %1936 = vmatpush1.msra.mxu0 0.0
      %1937 = vmatprep.subr.mxu0 0.0
      %1938 = vmatpush1.msra.mxu0 0.0
      %1939 = vmatprep.subr.mxu0 0.0
      %1940 = vmatpush1.msra.mxu0 0.0
      %1941 = vmatprep.subr.mxu0 0.0
      %1942 = vmatpush1.msra.mxu0 0.0
      %1943 = vmatprep.subr.mxu0 0.0
      %1944 = vmatpush1.msra.mxu0 0.0
      %1945 = vmatprep.mubr.f32.mxu0 0.0
      %1946 = vmatmul.mubr.f32.gmra.mrb[0].mxu0 %v1876
      %v1947 = vpop.f32.mrb[0].mxu0
      %v1948 = vadd.f32 1e-12, %v1947
      %v1949 = vpop.f32.mrb[0].mxu0
      %1950 = vmatprep.mubr.f32.mxu0 0.0
      %1951 = vmatmul.mubr.f32.gmra.mrb[0].mxu0 %v1879
      %v1952 = vpop.f32.mrb[0].mxu0
      %v1953 = vadd.f32 1e-12, %v1952
      %v1954 = vpop.f32.mrb[0].mxu0
      %1955 = vdwg.mxu0
      %v1957 = vsel %vm976, %v1739, 0
      %v1960 = vsel %vm976, %v1741, 0
      %1962 = vmatprep.subr.mxu0 0.0
      %1963 = vmatpush1.msra.mxu0 %v1771
      %1964 = vmatprep.subr.mxu0 0.0
      %1965 = vmatpush1.msra.mxu0 %v1773
      %1966 = vmatprep.subr.mxu0 0.0
      %1967 = vmatpush1.msra.mxu0 0.0
      %1968 = vmatprep.subr.mxu0 0.0
      %1969 = vmatpush1.msra.mxu0 0.0
      %1970 = vmatprep.subr.mxu0 0.0
      %1971 = vmatpush1.msra.mxu0 0.0
      %1972 = vmatprep.subr.mxu0 0.0
      %1973 = vmatpush1.msra.mxu0 0.0
      %1974 = vmatprep.subr.mxu0 0.0
      %1975 = vmatpush1.msra.mxu0 0.0
      %1976 = vmatprep.subr.mxu0 0.0
      %1977 = vmatpush1.msra.mxu0 0.0
      %1978 = vmatprep.subr.mxu0 0.0
      %1979 = vmatpush1.msra.mxu0 0.0
      %1980 = vmatprep.subr.mxu0 0.0
      %1981 = vmatpush1.msra.mxu0 0.0
      %1982 = vmatprep.subr.mxu0 0.0
      %1983 = vmatpush1.msra.mxu0 0.0
      %1984 = vmatprep.subr.mxu0 0.0
      %1985 = vmatpush1.msra.mxu0 0.0
      %1986 = vmatprep.subr.mxu0 0.0
      %1987 = vmatpush1.msra.mxu0 0.0
      %1988 = vmatprep.subr.mxu0 0.0
      %1989 = vmatpush1.msra.mxu0 0.0
      %1990 = vmatprep.subr.mxu0 0.0
      %1991 = vmatpush1.msra.mxu0 0.0
      %1992 = vmatprep.subr.mxu0 0.0
      %1993 = vmatpush1.msra.mxu0 0.0
      %1994 = vmatprep.subr.mxu0 0.0
      %1995 = vmatpush1.msra.mxu0 0.0
      %1996 = vmatprep.subr.mxu0 0.0
      %1997 = vmatpush1.msra.mxu0 0.0
      %1998 = vmatprep.subr.mxu0 0.0
      %1999 = vmatpush1.msra.mxu0 0.0
      %2000 = vmatprep.subr.mxu0 0.0
      %2001 = vmatpush1.msra.mxu0 0.0
      %2002 = vmatprep.subr.mxu0 0.0
      %2003 = vmatpush1.msra.mxu0 0.0
      %2004 = vmatprep.subr.mxu0 0.0
      %2005 = vmatpush1.msra.mxu0 0.0
      %2006 = vmatprep.subr.mxu0 0.0
      %2007 = vmatpush1.msra.mxu0 0.0
      %2008 = vmatprep.subr.mxu0 0.0
      %2009 = vmatpush1.msra.mxu0 0.0
      %2010 = vmatprep.subr.mxu0 0.0
      %2011 = vmatpush1.msra.mxu0 0.0
      %2012 = vmatprep.subr.mxu0 0.0
      %2013 = vmatpush1.msra.mxu0 0.0
      %2014 = vmatprep.subr.mxu0 0.0
      %2015 = vmatpush1.msra.mxu0 0.0
      %2016 = vmatprep.subr.mxu0 0.0
      %2017 = vmatpush1.msra.mxu0 0.0
      %2018 = vmatprep.subr.mxu0 0.0
      %2019 = vmatpush1.msra.mxu0 0.0
      %2020 = vmatprep.subr.mxu0 0.0
      %2021 = vmatpush1.msra.mxu0 0.0
      %2022 = vmatprep.subr.mxu0 0.0
      %2023 = vmatpush1.msra.mxu0 0.0
      %2024 = vmatprep.subr.mxu0 0.0
      %2025 = vmatpush1.msra.mxu0 0.0
      %2026 = vmatprep.mubr.f32.mxu0 0.0
      %2027 = vmatmul.mubr.f32.gmra.mrb[0].mxu0 %v1957
      %v2028 = vpop.f32.mrb[0].mxu0
      %v2029 = vadd.f32 1e-12, %v2028
      %v2030 = vpop.f32.mrb[0].mxu0
      %2031 = vmatprep.mubr.f32.mxu0 0.0
      %2032 = vmatmul.mubr.f32.gmra.mrb[0].mxu0 %v1960
      %v2033 = vpop.f32.mrb[0].mxu0
      %v2034 = vadd.f32 1e-12, %v2033
      %v2035 = vpop.f32.mrb[0].mxu0
      %2036 = vdwg.mxu0
      %v2038 = vsel %vm976, %v1743, 0
      %v2041 = vsel %vm976, %v1745, 0
      %2043 = vmatprep.subr.mxu0 0.0
      %2044 = vmatpush1.msra.mxu0 %v1775
      %2045 = vmatprep.subr.mxu0 0.0
      %2046 = vmatpush1.msra.mxu0 %v1777
      %2047 = vmatprep.subr.mxu0 0.0
      %2048 = vmatpush1.msra.mxu0 0.0
      %2049 = vmatprep.subr.mxu0 0.0
      %2050 = vmatpush1.msra.mxu0 0.0
      %2051 = vmatprep.subr.mxu0 0.0
      %2052 = vmatpush1.msra.mxu0 0.0
      %2053 = vmatprep.subr.mxu0 0.0
      %2054 = vmatpush1.msra.mxu0 0.0
      %2055 = vmatprep.subr.mxu0 0.0
      %2056 = vmatpush1.msra.mxu0 0.0
      %2057 = vmatprep.subr.mxu0 0.0
      %2058 = vmatpush1.msra.mxu0 0.0
      %2059 = vmatprep.subr.mxu0 0.0
      %2060 = vmatpush1.msra.mxu0 0.0
      %2061 = vmatprep.subr.mxu0 0.0
      %2062 = vmatpush1.msra.mxu0 0.0
      %2063 = vmatprep.subr.mxu0 0.0
      %2064 = vmatpush1.msra.mxu0 0.0
      %2065 = vmatprep.subr.mxu0 0.0
      %2066 = vmatpush1.msra.mxu0 0.0
      %2067 = vmatprep.subr.mxu0 0.0
      %2068 = vmatpush1.msra.mxu0 0.0
      %2069 = vmatprep.subr.mxu0 0.0
      %2070 = vmatpush1.msra.mxu0 0.0
      %2071 = vmatprep.subr.mxu0 0.0
      %2072 = vmatpush1.msra.mxu0 0.0
      %2073 = vmatprep.subr.mxu0 0.0
      %2074 = vmatpush1.msra.mxu0 0.0
      %2075 = vmatprep.subr.mxu0 0.0
      %2076 = vmatpush1.msra.mxu0 0.0
      %2077 = vmatprep.subr.mxu0 0.0
      %2078 = vmatpush1.msra.mxu0 0.0
      %2079 = vmatprep.subr.mxu0 0.0
      %2080 = vmatpush1.msra.mxu0 0.0
      %2081 = vmatprep.subr.mxu0 0.0
      %2082 = vmatpush1.msra.mxu0 0.0
      %2083 = vmatprep.subr.mxu0 0.0
      %2084 = vmatpush1.msra.mxu0 0.0
      %2085 = vmatprep.subr.mxu0 0.0
      %2086 = vmatpush1.msra.mxu0 0.0
      %2087 = vmatprep.subr.mxu0 0.0
      %2088 = vmatpush1.msra.mxu0 0.0
      %2089 = vmatprep.subr.mxu0 0.0
      %2090 = vmatpush1.msra.mxu0 0.0
      %2091 = vmatprep.subr.mxu0 0.0
      %2092 = vmatpush1.msra.mxu0 0.0
      %2093 = vmatprep.subr.mxu0 0.0
      %2094 = vmatpush1.msra.mxu0 0.0
      %2095 = vmatprep.subr.mxu0 0.0
      %2096 = vmatpush1.msra.mxu0 0.0
      %2097 = vmatprep.subr.mxu0 0.0
      %2098 = vmatpush1.msra.mxu0 0.0
      %2099 = vmatprep.subr.mxu0 0.0
      %2100 = vmatpush1.msra.mxu0 0.0
      %2101 = vmatprep.subr.mxu0 0.0
      %2102 = vmatpush1.msra.mxu0 0.0
      %2103 = vmatprep.subr.mxu0 0.0
      %2104 = vmatpush1.msra.mxu0 0.0
      %2105 = vmatprep.subr.mxu0 0.0
      %2106 = vmatpush1.msra.mxu0 0.0
      %2107 = vmatprep.mubr.f32.mxu0 0.0
      %2108 = vmatmul.mubr.f32.gmra.mrb[0].mxu0 %v2038
      %v2109 = vpop.f32.mrb[0].mxu0
      %v2110 = vadd.f32 1e-12, %v2109
      %v2111 = vpop.f32.mrb[0].mxu0
      %2112 = vmatprep.mubr.f32.mxu0 0.0
      %2113 = vmatmul.mubr.f32.gmra.mrb[0].mxu0 %v2041
      %v2114 = vpop.f32.mrb[0].mxu0
      %v2115 = vadd.f32 1e-12, %v2114
      %v2116 = vpop.f32.mrb[0].mxu0
      %2117 = vdwg.mxu0
      %v2119 = vsel %vm976, %v1747, 0
      %v2122 = vsel %vm976, %v1749, 0
      %2124 = vmatprep.subr.mxu0 0.0
      %2125 = vmatpush1.msra.mxu0 %v1779
      %2126 = vmatprep.subr.mxu0 0.0
      %2127 = vmatpush1.msra.mxu0 %v1781
      %2128 = vmatprep.subr.mxu0 0.0
      %2129 = vmatpush1.msra.mxu0 0.0
      %2130 = vmatprep.subr.mxu0 0.0
      %2131 = vmatpush1.msra.mxu0 0.0
      %2132 = vmatprep.subr.mxu0 0.0
      %2133 = vmatpush1.msra.mxu0 0.0
      %2134 = vmatprep.subr.mxu0 0.0
      %2135 = vmatpush1.msra.mxu0 0.0
      %2136 = vmatprep.subr.mxu0 0.0
      %2137 = vmatpush1.msra.mxu0 0.0
      %2138 = vmatprep.subr.mxu0 0.0
      %2139 = vmatpush1.msra.mxu0 0.0
      %2140 = vmatprep.subr.mxu0 0.0
      %2141 = vmatpush1.msra.mxu0 0.0
      %2142 = vmatprep.subr.mxu0 0.0
      %2143 = vmatpush1.msra.mxu0 0.0
      %2144 = vmatprep.subr.mxu0 0.0
      %2145 = vmatpush1.msra.mxu0 0.0
      %2146 = vmatprep.subr.mxu0 0.0
      %2147 = vmatpush1.msra.mxu0 0.0
      %2148 = vmatprep.subr.mxu0 0.0
      %2149 = vmatpush1.msra.mxu0 0.0
      %2150 = vmatprep.subr.mxu0 0.0
      %2151 = vmatpush1.msra.mxu0 0.0
      %2152 = vmatprep.subr.mxu0 0.0
      %2153 = vmatpush1.msra.mxu0 0.0
      %2154 = vmatprep.subr.mxu0 0.0
      %2155 = vmatpush1.msra.mxu0 0.0
      %2156 = vmatprep.subr.mxu0 0.0
      %2157 = vmatpush1.msra.mxu0 0.0
      %2158 = vmatprep.subr.mxu0 0.0
      %2159 = vmatpush1.msra.mxu0 0.0
      %2160 = vmatprep.subr.mxu0 0.0
      %2161 = vmatpush1.msra.mxu0 0.0
      %2162 = vmatprep.subr.mxu0 0.0
      %2163 = vmatpush1.msra.mxu0 0.0
      %2164 = vmatprep.subr.mxu0 0.0
      %2165 = vmatpush1.msra.mxu0 0.0
      %2166 = vmatprep.subr.mxu0 0.0
      %2167 = vmatpush1.msra.mxu0 0.0
      %2168 = vmatprep.subr.mxu0 0.0
      %2169 = vmatpush1.msra.mxu0 0.0
      %2170 = vmatprep.subr.mxu0 0.0
      %2171 = vmatpush1.msra.mxu0 0.0
      %2172 = vmatprep.subr.mxu0 0.0
      %2173 = vmatpush1.msra.mxu0 0.0
      %2174 = vmatprep.subr.mxu0 0.0
      %2175 = vmatpush1.msra.mxu0 0.0
      %2176 = vmatprep.subr.mxu0 0.0
      %2177 = vmatpush1.msra.mxu0 0.0
      %2178 = vmatprep.subr.mxu0 0.0
      %2179 = vmatpush1.msra.mxu0 0.0
      %2180 = vmatprep.subr.mxu0 0.0
      %2181 = vmatpush1.msra.mxu0 0.0
      %2182 = vmatprep.subr.mxu0 0.0
      %2183 = vmatpush1.msra.mxu0 0.0
      %2184 = vmatprep.subr.mxu0 0.0
      %2185 = vmatpush1.msra.mxu0 0.0
      %2186 = vmatprep.subr.mxu0 0.0
      %2187 = vmatpush1.msra.mxu0 0.0
      %2188 = vmatprep.mubr.f32.mxu0 0.0
      %2189 = vmatmul.mubr.f32.gmra.mrb[0].mxu0 %v2119
      %v2190 = vpop.f32.mrb[0].mxu0
      %v2191 = vadd.f32 1e-12, %v2190
      %v2192 = vpop.f32.mrb[0].mxu0
      %2193 = vmatprep.mubr.f32.mxu0 0.0
      %2194 = vmatmul.mubr.f32.gmra.mrb[0].mxu0 %v2122
      %v2195 = vpop.f32.mrb[0].mxu0
      %v2196 = vadd.f32 1e-12, %v2195
      %v2197 = vpop.f32.mrb[0].mxu0
      %2198 = vdwg.mxu0
      %v2200 = vsel %vm976, %v1751, 0
      %v2203 = vsel %vm976, %v1753, 0
      %2205 = vmatprep.subr.mxu0 0.0
      %2206 = vmatpush1.msra.mxu0 %v1783
      %2207 = vmatprep.subr.mxu0 0.0
      %2208 = vmatpush1.msra.mxu0 %v1785
      %2209 = vmatprep.subr.mxu0 0.0
      %2210 = vmatpush1.msra.mxu0 0.0
      %2211 = vmatprep.subr.mxu0 0.0
      %2212 = vmatpush1.msra.mxu0 0.0
      %2213 = vmatprep.subr.mxu0 0.0
      %2214 = vmatpush1.msra.mxu0 0.0
      %2215 = vmatprep.subr.mxu0 0.0
      %2216 = vmatpush1.msra.mxu0 0.0
      %2217 = vmatprep.subr.mxu0 0.0
      %2218 = vmatpush1.msra.mxu0 0.0
      %2219 = vmatprep.subr.mxu0 0.0
      %2220 = vmatpush1.msra.mxu0 0.0
      %2221 = vmatprep.subr.mxu0 0.0
      %2222 = vmatpush1.msra.mxu0 0.0
      %2223 = vmatprep.subr.mxu0 0.0
      %2224 = vmatpush1.msra.mxu0 0.0
      %2225 = vmatprep.subr.mxu0 0.0
      %2226 = vmatpush1.msra.mxu0 0.0
      %2227 = vmatprep.subr.mxu0 0.0
      %2228 = vmatpush1.msra.mxu0 0.0
      %2229 = vmatprep.subr.mxu0 0.0
      %2230 = vmatpush1.msra.mxu0 0.0
      %2231 = vmatprep.subr.mxu0 0.0
      %2232 = vmatpush1.msra.mxu0 0.0
      %2233 = vmatprep.subr.mxu0 0.0
      %2234 = vmatpush1.msra.mxu0 0.0
      %2235 = vmatprep.subr.mxu0 0.0
      %2236 = vmatpush1.msra.mxu0 0.0
      %2237 = vmatprep.subr.mxu0 0.0
      %2238 = vmatpush1.msra.mxu0 0.0
      %2239 = vmatprep.subr.mxu0 0.0
      %2240 = vmatpush1.msra.mxu0 0.0
      %2241 = vmatprep.subr.mxu0 0.0
      %2242 = vmatpush1.msra.mxu0 0.0
      %2243 = vmatprep.subr.mxu0 0.0
      %2244 = vmatpush1.msra.mxu0 0.0
      %2245 = vmatprep.subr.mxu0 0.0
      %2246 = vmatpush1.msra.mxu0 0.0
      %2247 = vmatprep.subr.mxu0 0.0
      %2248 = vmatpush1.msra.mxu0 0.0
      %2249 = vmatprep.subr.mxu0 0.0
      %2250 = vmatpush1.msra.mxu0 0.0
      %2251 = vmatprep.subr.mxu0 0.0
      %2252 = vmatpush1.msra.mxu0 0.0
      %2253 = vmatprep.subr.mxu0 0.0
      %2254 = vmatpush1.msra.mxu0 0.0
      %2255 = vmatprep.subr.mxu0 0.0
      %2256 = vmatpush1.msra.mxu0 0.0
      %2257 = vmatprep.subr.mxu0 0.0
      %2258 = vmatpush1.msra.mxu0 0.0
      %2259 = vmatprep.subr.mxu0 0.0
      %2260 = vmatpush1.msra.mxu0 0.0
      %2261 = vmatprep.subr.mxu0 0.0
      %2262 = vmatpush1.msra.mxu0 0.0
      %2263 = vmatprep.subr.mxu0 0.0
      %2264 = vmatpush1.msra.mxu0 0.0
      %2265 = vmatprep.subr.mxu0 0.0
      %2266 = vmatpush1.msra.mxu0 0.0
      %2267 = vmatprep.subr.mxu0 0.0
      %2268 = vmatpush1.msra.mxu0 0.0
      %2269 = vmatprep.mubr.f32.mxu0 0.0
      %2270 = vmatmul.mubr.f32.gmra.mrb[0].mxu0 %v2200
      %v2271 = vpop.f32.mrb[0].mxu0
      %v2272 = vadd.f32 1e-12, %v2271
      %v2273 = vpop.f32.mrb[0].mxu0
      %2274 = vmatprep.mubr.f32.mxu0 0.0
      %2275 = vmatmul.mubr.f32.gmra.mrb[0].mxu0 %v2203
      %v2276 = vpop.f32.mrb[0].mxu0
      %v2277 = vadd.f32 1e-12, %v2276
      %v2278 = vpop.f32.mrb[0].mxu0
      %2279 = vdwg.mxu0
      %v2281 = vsel %vm976, %v1755, 0
      %v2284 = vsel %vm976, %v1757, 0
      %2286 = vmatprep.subr.mxu0 0.0
      %2287 = vmatpush1.msra.mxu0 %v1787
      %2288 = vmatprep.subr.mxu0 0.0
      %2289 = vmatpush1.msra.mxu0 %v1789
      %2290 = vmatprep.subr.mxu0 0.0
      %2291 = vmatpush1.msra.mxu0 0.0
      %2292 = vmatprep.subr.mxu0 0.0
      %2293 = vmatpush1.msra.mxu0 0.0
      %2294 = vmatprep.subr.mxu0 0.0
      %2295 = vmatpush1.msra.mxu0 0.0
      %2296 = vmatprep.subr.mxu0 0.0
      %2297 = vmatpush1.msra.mxu0 0.0
      %2298 = vmatprep.subr.mxu0 0.0
      %2299 = vmatpush1.msra.mxu0 0.0
      %2300 = vmatprep.subr.mxu0 0.0
      %2301 = vmatpush1.msra.mxu0 0.0
      %2302 = vmatprep.subr.mxu0 0.0
      %2303 = vmatpush1.msra.mxu0 0.0
      %2304 = vmatprep.subr.mxu0 0.0
      %2305 = vmatpush1.msra.mxu0 0.0
      %2306 = vmatprep.subr.mxu0 0.0
      %2307 = vmatpush1.msra.mxu0 0.0
      %2308 = vmatprep.subr.mxu0 0.0
      %2309 = vmatpush1.msra.mxu0 0.0
      %2310 = vmatprep.subr.mxu0 0.0
      %2311 = vmatpush1.msra.mxu0 0.0
      %2312 = vmatprep.subr.mxu0 0.0
      %2313 = vmatpush1.msra.mxu0 0.0
      %2314 = vmatprep.subr.mxu0 0.0
      %2315 = vmatpush1.msra.mxu0 0.0
      %2316 = vmatprep.subr.mxu0 0.0
      %2317 = vmatpush1.msra.mxu0 0.0
      %2318 = vmatprep.subr.mxu0 0.0
      %2319 = vmatpush1.msra.mxu0 0.0
      %2320 = vmatprep.subr.mxu0 0.0
      %2321 = vmatpush1.msra.mxu0 0.0
      %2322 = vmatprep.subr.mxu0 0.0
      %2323 = vmatpush1.msra.mxu0 0.0
      %2324 = vmatprep.subr.mxu0 0.0
      %2325 = vmatpush1.msra.mxu0 0.0
      %2326 = vmatprep.subr.mxu0 0.0
      %2327 = vmatpush1.msra.mxu0 0.0
      %2328 = vmatprep.subr.mxu0 0.0
      %2329 = vmatpush1.msra.mxu0 0.0
      %2330 = vmatprep.subr.mxu0 0.0
      %2331 = vmatpush1.msra.mxu0 0.0
      %2332 = vmatprep.subr.mxu0 0.0
      %2333 = vmatpush1.msra.mxu0 0.0
      %2334 = vmatprep.subr.mxu0 0.0
      %2335 = vmatpush1.msra.mxu0 0.0
      %2336 = vmatprep.subr.mxu0 0.0
      %2337 = vmatpush1.msra.mxu0 0.0
      %2338 = vmatprep.subr.mxu0 0.0
      %2339 = vmatpush1.msra.mxu0 0.0
      %2340 = vmatprep.subr.mxu0 0.0
      %2341 = vmatpush1.msra.mxu0 0.0
      %2342 = vmatprep.subr.mxu0 0.0
      %2343 = vmatpush1.msra.mxu0 0.0
      %2344 = vmatprep.subr.mxu0 0.0
      %2345 = vmatpush1.msra.mxu0 0.0
      %2346 = vmatprep.subr.mxu0 0.0
      %2347 = vmatpush1.msra.mxu0 0.0
      %2348 = vmatprep.subr.mxu0 0.0
      %2349 = vmatpush1.msra.mxu0 0.0
      %2350 = vmatprep.mubr.f32.mxu0 0.0
      %2351 = vmatmul.mubr.f32.gmra.mrb[0].mxu0 %v2281
      %v2352 = vpop.f32.mrb[0].mxu0
      %v2353 = vadd.f32 1e-12, %v2352
      %v2354 = vpop.f32.mrb[0].mxu0
      %2355 = vmatprep.mubr.f32.mxu0 0.0
      %2356 = vmatmul.mubr.f32.gmra.mrb[0].mxu0 %v2284
      %v2357 = vpop.f32.mrb[0].mxu0
      %v2358 = vadd.f32 1e-12, %v2357
      %v2359 = vpop.f32.mrb[0].mxu0
      %2360 = vdwg.mxu0
      %v2362 = vsel %vm976, %v1759, 0
      %v2365 = vsel %vm976, %v1761, 0
      %2367 = vmatprep.subr.mxu0 0.0
      %2368 = vmatpush1.msra.mxu0 %v1791
      %2369 = vmatprep.subr.mxu0 0.0
      %2370 = vmatpush1.msra.mxu0 %v1793
      %2371 = vmatprep.subr.mxu0 0.0
      %2372 = vmatpush1.msra.mxu0 0.0
      %2373 = vmatprep.subr.mxu0 0.0
      %2374 = vmatpush1.msra.mxu0 0.0
      %2375 = vmatprep.subr.mxu0 0.0
      %2376 = vmatpush1.msra.mxu0 0.0
      %2377 = vmatprep.subr.mxu0 0.0
      %2378 = vmatpush1.msra.mxu0 0.0
      %2379 = vmatprep.subr.mxu0 0.0
      %2380 = vmatpush1.msra.mxu0 0.0
      %2381 = vmatprep.subr.mxu0 0.0
      %2382 = vmatpush1.msra.mxu0 0.0
      %2383 = vmatprep.subr.mxu0 0.0
      %2384 = vmatpush1.msra.mxu0 0.0
      %2385 = vmatprep.subr.mxu0 0.0
      %2386 = vmatpush1.msra.mxu0 0.0
      %2387 = vmatprep.subr.mxu0 0.0
      %2388 = vmatpush1.msra.mxu0 0.0
      %2389 = vmatprep.subr.mxu0 0.0
      %2390 = vmatpush1.msra.mxu0 0.0
      %2391 = vmatprep.subr.mxu0 0.0
      %2392 = vmatpush1.msra.mxu0 0.0
      %2393 = vmatprep.subr.mxu0 0.0
      %2394 = vmatpush1.msra.mxu0 0.0
      %2395 = vmatprep.subr.mxu0 0.0
      %2396 = vmatpush1.msra.mxu0 0.0
      %2397 = vmatprep.subr.mxu0 0.0
      %2398 = vmatpush1.msra.mxu0 0.0
      %2399 = vmatprep.subr.mxu0 0.0
      %2400 = vmatpush1.msra.mxu0 0.0
      %2401 = vmatprep.subr.mxu0 0.0
      %2402 = vmatpush1.msra.mxu0 0.0
      %2403 = vmatprep.subr.mxu0 0.0
      %2404 = vmatpush1.msra.mxu0 0.0
      %2405 = vmatprep.subr.mxu0 0.0
      %2406 = vmatpush1.msra.mxu0 0.0
      %2407 = vmatprep.subr.mxu0 0.0
      %2408 = vmatpush1.msra.mxu0 0.0
      %2409 = vmatprep.subr.mxu0 0.0
      %2410 = vmatpush1.msra.mxu0 0.0
      %2411 = vmatprep.subr.mxu0 0.0
      %2412 = vmatpush1.msra.mxu0 0.0
      %2413 = vmatprep.subr.mxu0 0.0
      %2414 = vmatpush1.msra.mxu0 0.0
      %2415 = vmatprep.subr.mxu0 0.0
      %2416 = vmatpush1.msra.mxu0 0.0
      %2417 = vmatprep.subr.mxu0 0.0
      %2418 = vmatpush1.msra.mxu0 0.0
      %2419 = vmatprep.subr.mxu0 0.0
      %2420 = vmatpush1.msra.mxu0 0.0
      %2421 = vmatprep.subr.mxu0 0.0
      %2422 = vmatpush1.msra.mxu0 0.0
      %2423 = vmatprep.subr.mxu0 0.0
      %2424 = vmatpush1.msra.mxu0 0.0
      %2425 = vmatprep.subr.mxu0 0.0
      %2426 = vmatpush1.msra.mxu0 0.0
      %2427 = vmatprep.subr.mxu0 0.0
      %2428 = vmatpush1.msra.mxu0 0.0
      %2429 = vmatprep.subr.mxu0 0.0
      %2430 = vmatpush1.msra.mxu0 0.0
      %2431 = vmatprep.mubr.f32.mxu0 0.0
      %2432 = vmatmul.mubr.f32.gmra.mrb[0].mxu0 %v2362
      %v2433 = vpop.f32.mrb[0].mxu0
      %v2434 = vadd.f32 1e-12, %v2433
      %v2435 = vpop.f32.mrb[0].mxu0
      %2436 = vmatprep.mubr.f32.mxu0 0.0
      %2437 = vmatmul.mubr.f32.gmra.mrb[0].mxu0 %v2365
      %v2438 = vpop.f32.mrb[0].mxu0
      %v2439 = vadd.f32 1e-12, %v2438
      %v2440 = vpop.f32.mrb[0].mxu0
      %2441 = vdwg.mxu0
      %v2442 = vlog2.pop %v1867
      %v2443 = vmul.f32 %v2442, 0.6931472
      %v2444 = vlog2.pop %v1872
      %v2445 = vmul.f32 %v2444, 0.6931472
      %v2446 = vlog2.pop %v1948
      %v2447 = vmul.f32 %v2446, 0.6931472
      %v2448 = vlog2.pop %v1953
      %v2449 = vmul.f32 %v2448, 0.6931472
      %v2450 = vlog2.pop %v2029
      %v2451 = vmul.f32 %v2450, 0.6931472
      %v2452 = vlog2.pop %v2034
      %v2453 = vmul.f32 %v2452, 0.6931472
      %v2454 = vlog2.pop %v2110
      %v2455 = vmul.f32 %v2454, 0.6931472
      %v2456 = vlog2.pop %v2115
      %v2457 = vmul.f32 %v2456, 0.6931472
      %v2458 = vlog2.pop %v2191
      %v2459 = vmul.f32 %v2458, 0.6931472
      %v2460 = vlog2.pop %v2196
      %v2461 = vmul.f32 %v2460, 0.6931472
      %v2462 = vlog2.pop %v2272
      %v2463 = vmul.f32 %v2462, 0.6931472
      %v2464 = vlog2.pop %v2277
      %v2465 = vmul.f32 %v2464, 0.6931472
      %v2466 = vlog2.pop %v2353
      %v2467 = vmul.f32 %v2466, 0.6931472
      %v2468 = vlog2.pop %v2358
      %v2469 = vmul.f32 %v2468, 0.6931472
      %v2470 = vlog2.pop %v2434
      %v2471 = vmul.f32 %v2470, 0.6931472
      %v2472 = vlog2.pop %v2439
      %v2473 = vmul.f32 %v2472, 0.6931472
      %2474 = vst.msk [vmem:[%s246] sm:$0xff] %vm698, %v2443
      %2475 = vst.msk [vmem:[%s246 + $0x8] sm:$0xff] %vm698, %v2445
      %2476 = vst.msk [vmem:[%s246 + $0x10] sm:$0xff] %vm698, %v2447
      %2477 = vst.msk [vmem:[%s246 + $0x18] sm:$0xff] %vm698, %v2449
      %2478 = vst.msk [vmem:[%s246 + $0x20] sm:$0xff] %vm698, %v2451
      %2479 = vst.msk [vmem:[%s246 + $0x28] sm:$0xff] %vm698, %v2453
      %2480 = vst.msk [vmem:[%s246 + $0x30] sm:$0xff] %vm698, %v2455
      %2481 = vst.msk [vmem:[%s246 + $0x38] sm:$0xff] %vm698, %v2457
      %2482 = vst.msk [vmem:[%s246 + $0x40] sm:$0xff] %vm698, %v2459
      %2483 = vst.msk [vmem:[%s246 + $0x48] sm:$0xff] %vm698, %v2461
      %2484 = vst.msk [vmem:[%s246 + $0x50] sm:$0xff] %vm698, %v2463
      %2485 = vst.msk [vmem:[%s246 + $0x58] sm:$0xff] %vm698, %v2465
      %2486 = vst.msk [vmem:[%s246 + $0x60] sm:$0xff] %vm698, %v2467
      %2487 = vst.msk [vmem:[%s246 + $0x68] sm:$0xff] %vm698, %v2469
      %2488 = vst.msk [vmem:[%s246 + $0x70] sm:$0xff] %vm698, %v2471
      %2489 = vst.msk [vmem:[%s246 + $0x78] sm:$0xff] %vm698, %v2473
      %s2490 = sld [smem:[#allocation3]]
      %p2491 = scmp.eq.s32.totalorder %s2490, 1
      %v2492 = vsel %vm698, %v1763, 0.0
      %2493 = vadd.xlane.f32.xlu0 %v2492
      %v2494 = vpop.xlane.xlu0 %2493
      %v2495 = vsel %vm698, %v1765, 0.0
      %2496 = vadd.xlane.f32.xlu0 %v2495
      %v2497 = vpop.xlane.xlu0 %2496
      %v2498 = vsel %vm698, %v1767, 0.0
      %2499 = vadd.xlane.f32.xlu0 %v2498
      %v2500 = vpop.xlane.xlu0 %2499
      %v2501 = vsel %vm698, %v1769, 0.0
      %2502 = vadd.xlane.f32.xlu0 %v2501
      %v2503 = vpop.xlane.xlu0 %2502
      %v2504 = vsel %vm698, %v1771, 0.0
      %2505 = vadd.xlane.f32.xlu0 %v2504
      %v2506 = vpop.xlane.xlu0 %2505
      %v2507 = vsel %vm698, %v1773, 0.0
      %2508 = vadd.xlane.f32.xlu0 %v2507
      %v2509 = vpop.xlane.xlu0 %2508
      %v2510 = vsel %vm698, %v1775, 0.0
      %2511 = vadd.xlane.f32.xlu0 %v2510
      %v2512 = vpop.xlane.xlu0 %2511
      %v2513 = vsel %vm698, %v1777, 0.0
      %2514 = vadd.xlane.f32.xlu0 %v2513
      %v2515 = vpop.xlane.xlu0 %2514
      %v2516 = vsel %vm698, %v1779, 0.0
      %2517 = vadd.xlane.f32.xlu0 %v2516
      %v2518 = vpop.xlane.xlu0 %2517
      %v2519 = vsel %vm698, %v1781, 0.0
      %2520 = vadd.xlane.f32.xlu0 %v2519
      %v2521 = vpop.xlane.xlu0 %2520
      %v2522 = vsel %vm698, %v1783, 0.0
      %2523 = vadd.xlane.f32.xlu0 %v2522
      %v2524 = vpop.xlane.xlu0 %2523
      %v2525 = vsel %vm698, %v1785, 0.0
      %2526 = vadd.xlane.f32.xlu0 %v2525
      %v2527 = vpop.xlane.xlu0 %2526
      %v2528 = vsel %vm698, %v1787, 0.0
      %2529 = vadd.xlane.f32.xlu0 %v2528
      %v2530 = vpop.xlane.xlu0 %2529
      %v2531 = vsel %vm698, %v1789, 0.0
      %2532 = vadd.xlane.f32.xlu0 %v2531
      %v2533 = vpop.xlane.xlu0 %2532
      %v2534 = vsel %vm698, %v1791, 0.0
      %2535 = vadd.xlane.f32.xlu0 %v2534
      %v2536 = vpop.xlane.xlu0 %2535
      %v2537 = vsel %vm698, %v1793, 0.0
      %2538 = vadd.xlane.f32.xlu0 %v2537
      %v2539 = vpop.xlane.xlu0 %2538
      %v2540 = vrcp.pop 8.0
      %v2541 = vmul.f32 %v2494, %v2540
      %v2542 = vmul.f32 %v2497, %v2540
      %v2543 = vmul.f32 %v2500, %v2540
      %v2544 = vmul.f32 %v2503, %v2540
      %v2545 = vmul.f32 %v2506, %v2540
      %v2546 = vmul.f32 %v2509, %v2540
      %v2547 = vmul.f32 %v2512, %v2540
      %v2548 = vmul.f32 %v2515, %v2540
      %v2549 = vmul.f32 %v2518, %v2540
      %v2550 = vmul.f32 %v2521, %v2540
      %v2551 = vmul.f32 %v2524, %v2540
      %v2552 = vmul.f32 %v2527, %v2540
      %v2553 = vmul.f32 %v2530, %v2540
      %v2554 = vmul.f32 %v2533, %v2540
      %v2555 = vmul.f32 %v2536, %v2540
      %v2556 = vmul.f32 %v2539, %v2540
      %v2557 = vsel %vm698, %v248, 0.0
      %2558 = vadd.xlane.f32.xlu0 %v2557
      %v2559 = vpop.xlane.xlu0 %2558
      %v2560 = vsel %vm698, %v249, 0.0
      %2561 = vadd.xlane.f32.xlu0 %v2560
      %v2562 = vpop.xlane.xlu0 %2561
      %v2563 = vsel %vm698, %v250, 0.0
      %2564 = vadd.xlane.f32.xlu0 %v2563
      %v2565 = vpop.xlane.xlu0 %2564
      %v2566 = vsel %vm698, %v251, 0.0
      %2567 = vadd.xlane.f32.xlu0 %v2566
      %v2568 = vpop.xlane.xlu0 %2567
      %v2569 = vsel %vm698, %v252, 0.0
      %2570 = vadd.xlane.f32.xlu0 %v2569
      %v2571 = vpop.xlane.xlu0 %2570
      %v2572 = vsel %vm698, %v253, 0.0
      %2573 = vadd.xlane.f32.xlu0 %v2572
      %v2574 = vpop.xlane.xlu0 %2573
      %v2575 = vsel %vm698, %v254, 0.0
      %2576 = vadd.xlane.f32.xlu0 %v2575
      %v2577 = vpop.xlane.xlu0 %2576
      %v2578 = vsel %vm698, %v255, 0.0
      %2579 = vadd.xlane.f32.xlu0 %v2578
      %v2580 = vpop.xlane.xlu0 %2579
      %v2581 = vsel %vm698, %v256, 0.0
      %2582 = vadd.xlane.f32.xlu0 %v2581
      %v2583 = vpop.xlane.xlu0 %2582
      %v2584 = vsel %vm698, %v257, 0.0
      %2585 = vadd.xlane.f32.xlu0 %v2584
      %v2586 = vpop.xlane.xlu0 %2585
      %v2587 = vsel %vm698, %v258, 0.0
      %2588 = vadd.xlane.f32.xlu0 %v2587
      %v2589 = vpop.xlane.xlu0 %2588
      %v2590 = vsel %vm698, %v259, 0.0
      %2591 = vadd.xlane.f32.xlu0 %v2590
      %v2592 = vpop.xlane.xlu0 %2591
      %v2593 = vsel %vm698, %v260, 0.0
      %2594 = vadd.xlane.f32.xlu0 %v2593
      %v2595 = vpop.xlane.xlu0 %2594
      %v2596 = vsel %vm698, %v261, 0.0
      %2597 = vadd.xlane.f32.xlu0 %v2596
      %v2598 = vpop.xlane.xlu0 %2597
      %v2599 = vsel %vm698, %v262, 0.0
      %2600 = vadd.xlane.f32.xlu0 %v2599
      %v2601 = vpop.xlane.xlu0 %2600
      %v2602 = vsel %vm698, %v263, 0.0
      %2603 = vadd.xlane.f32.xlu0 %v2602
      %v2604 = vpop.xlane.xlu0 %2603
      %v2605 = vmul.f32 %v2559, %v2540
      %v2606 = vmul.f32 %v2562, %v2540
      %v2607 = vmul.f32 %v2565, %v2540
      %v2608 = vmul.f32 %v2568, %v2540
      %v2609 = vmul.f32 %v2571, %v2540
      %v2610 = vmul.f32 %v2574, %v2540
      %v2611 = vmul.f32 %v2577, %v2540
      %v2612 = vmul.f32 %v2580, %v2540
      %v2613 = vmul.f32 %v2583, %v2540
      %v2614 = vmul.f32 %v2586, %v2540
      %v2615 = vmul.f32 %v2589, %v2540
      %v2616 = vmul.f32 %v2592, %v2540
      %v2617 = vmul.f32 %v2595, %v2540
      %v2618 = vmul.f32 %v2598, %v2540
      %v2619 = vmul.f32 %v2601, %v2540
      %v2620 = vmul.f32 %v2604, %v2540
      %s2621 = scalar_select %p2491, 1, 0
      %v2622 = vstv %s2621
      %vm2623 = vcmp.eq.s32.totalorder %v2622, 1
      %v2624 = vsel %vm2623, %v2541, %v2605
      %v2625 = vsel %vm2623, %v2542, %v2606
      %v2626 = vsel %vm2623, %v2543, %v2607
      %v2627 = vsel %vm2623, %v2544, %v2608
      %v2628 = vsel %vm2623, %v2545, %v2609
      %v2629 = vsel %vm2623, %v2546, %v2610
      %v2630 = vsel %vm2623, %v2547, %v2611
      %v2631 = vsel %vm2623, %v2548, %v2612
      %v2632 = vsel %vm2623, %v2549, %v2613
      %v2633 = vsel %vm2623, %v2550, %v2614
      %v2634 = vsel %vm2623, %v2551, %v2615
      %v2635 = vsel %vm2623, %v2552, %v2616
      %v2636 = vsel %vm2623, %v2553, %v2617
      %v2637 = vsel %vm2623, %v2554, %v2618
      %v2638 = vsel %vm2623, %v2555, %v2619
      %v2639 = vsel %vm2623, %v2556, %v2620
      %v2656 = vadd.s32 %v886, 4294967280
      %v2657 = vlaneseq
      %v2658 = vshrl.u32 %v2657, 7
      %v2659 = vsub.s32 %v2656, %v2658
      %v2660 = vrot.slane %v2624, %v2659
      %v2661 = vadd.s32 %v886, 4294967272
      %v2662 = vlaneseq
      %v2663 = vshrl.u32 %v2662, 7
      %v2664 = vsub.s32 %v2661, %v2663
      %v2665 = vrot.slane %v2625, %v2664
      %vm2666 = vcmask 261312
      %v2667 = vsel %vm2666, %v2665, %v2660
      %v2668 = vlaneseq
      %v2669 = vshrl.u32 %v2668, 7
      %v2670 = vsub.s32 %v2656, %v2669
      %v2671 = vrot.slane %v2626, %v2670
      %v2672 = vlaneseq
      %v2673 = vshrl.u32 %v2672, 7
      %v2674 = vsub.s32 %v2661, %v2673
      %v2675 = vrot.slane %v2627, %v2674
      %v2676 = vsel %vm2666, %v2675, %v2671
      %v2677 = vlaneseq
      %v2678 = vshrl.u32 %v2677, 7
      %v2679 = vsub.s32 %v2656, %v2678
      %v2680 = vrot.slane %v2628, %v2679
      %v2681 = vlaneseq
      %v2682 = vshrl.u32 %v2681, 7
      %v2683 = vsub.s32 %v2661, %v2682
      %v2684 = vrot.slane %v2629, %v2683
      %v2685 = vsel %vm2666, %v2684, %v2680
      %v2686 = vlaneseq
      %v2687 = vshrl.u32 %v2686, 7
      %v2688 = vsub.s32 %v2656, %v2687
      %v2689 = vrot.slane %v2630, %v2688
      %v2690 = vlaneseq
      %v2691 = vshrl.u32 %v2690, 7
      %v2692 = vsub.s32 %v2661, %v2691
      %v2693 = vrot.slane %v2631, %v2692
      %v2694 = vsel %vm2666, %v2693, %v2689
      %v2695 = vlaneseq
      %v2696 = vshrl.u32 %v2695, 7
      %v2697 = vsub.s32 %v2656, %v2696
      %v2698 = vrot.slane %v2632, %v2697
      %v2699 = vlaneseq
      %v2700 = vshrl.u32 %v2699, 7
      %v2701 = vsub.s32 %v2661, %v2700
      %v2702 = vrot.slane %v2633, %v2701
      %v2703 = vsel %vm2666, %v2702, %v2698
      %v2704 = vlaneseq
      %v2705 = vshrl.u32 %v2704, 7
      %v2706 = vsub.s32 %v2656, %v2705
      %v2707 = vrot.slane %v2634, %v2706
      %v2708 = vlaneseq
      %v2709 = vshrl.u32 %v2708, 7
      %v2710 = vsub.s32 %v2661, %v2709
      %v2711 = vrot.slane %v2635, %v2710
      %v2712 = vsel %vm2666, %v2711, %v2707
      %v2713 = vlaneseq
      %v2714 = vshrl.u32 %v2713, 7
      %v2715 = vsub.s32 %v2656, %v2714
      %v2716 = vrot.slane %v2636, %v2715
      %v2717 = vlaneseq
      %v2718 = vshrl.u32 %v2717, 7
      %v2719 = vsub.s32 %v2661, %v2718
      %v2720 = vrot.slane %v2637, %v2719
      %v2721 = vsel %vm2666, %v2720, %v2716
      %v2722 = vlaneseq
      %v2723 = vshrl.u32 %v2722, 7
      %v2724 = vsub.s32 %v2656, %v2723
      %v2725 = vrot.slane %v2638, %v2724
      %v2726 = vlaneseq
      %v2727 = vshrl.u32 %v2726, 7
      %v2728 = vsub.s32 %v2661, %v2727
      %v2729 = vrot.slane %v2639, %v2728
      %v2730 = vsel %vm2666, %v2729, %v2725
      %v2731 = vsel %vm961, %v2676, %v2667
      %v2732 = vsel %vm963, %v2685, %v2731
      %v2733 = vsel %vm965, %v2694, %v2732
      %v2734 = vsel %vm967, %v2703, %v2733
      %v2735 = vsel %vm969, %v2712, %v2734
      %v2736 = vsel %vm971, %v2721, %v2735
      %v2737 = vsel %vm973, %v2730, %v2736
      %v2739 = vsel %vm976, %v1442, %v2737
      %vm2740 = vcmask 261120
      %2741 = vst.msk [vmem:[%s240] sm:$0xff] %vm2740, %v2739
      %p2742 = scmp.lt.s32.totalorder %s21, 1
      %s2743 = scalar_select %p2742, %s21, 1
      %s2744 = smul.addr %s2743, 8
      %s2745 = scalar_lea.vmem %s5, %s2744
      %s2746 = smul.u32 8, %s21
      %p2747 = scmp.lt.s32.totalorder %s2746, 15
      %s2748 = scalar_select %p2747, %s2746, 15
      %s2749 = smul.addr %s2748, 2
      %s2750 = smul.addr %s2749, 8
      %s2751 = scalar_lea.vmem %s6, %s2750
      // Predicated region
      $region37: #{nafa_forward.1} parent=35 // pred_check
        %p2752 = pneg %p128
      $region38: #{nafa_forward.1} parent=35 // pred_check_branch
        %2754 = sbr.rel (%p2752) target = $region40
      $region39: #{nafa_forward.1} parent=35 // pred_region
        _
      $region40: #{nafa_forward.1} parent=35 // pred_fallthru
        _
      // Predicated region
      $region41: #{nafa_forward.1} parent=35 // pred_check
        %p2755 = pneg %p154
      $region42: #{nafa_forward.1} parent=35 // pred_check_branch
        %2757 = sbr.rel (%p2755) target = $region44
      $region43: #{nafa_forward.1} parent=35 // pred_region
        %s2758 = smul.u32 8, %s21
      $region44: #{nafa_forward.1} parent=35 // pred_fallthru
        _
    $region36: #{nafa_forward.1} parent=5 // pred_fallthru
      _
    %p2759 = scmp.le.s32.totalorder 2, %s16
    // Predicated region
    $region45: #{nafa_forward.1} parent=5 // pred_check
      %p2760 = pneg %p2759
    $region46: #{nafa_forward.1} parent=5 // pred_check_branch
      %2762 = sbr.rel (%p2760) target = $region48
    $region47: #{nafa_forward.1} parent=5 // pred_region
      %s2763 = ssub.s32 %s16, 2
      // Predicated region
      $region49: #{nafa_forward.1} parent=47 // pred_check
        %p2764 = pneg %p134
      $region50: #{nafa_forward.1} parent=47 // pred_check_branch
        %2766 = sbr.rel (%p2764) target = $region52
      $region51: #{nafa_forward.1} parent=47 // pred_region
        %p2767 = scmp.lt.s32.totalorder %s22, 1
        %s2768 = scalar_select %p2767, %s22, 1
        %s2769 = smul.addr %s2768, 8
        %s2770 = scalar_lea.vmem %s5, %s2769
      $region52: #{nafa_forward.1} parent=47 // pred_fallthru
        _
      // Predicated region
      $region53: #{nafa_forward.1} parent=47 // pred_check
        %p2771 = pneg %p160
      $region54: #{nafa_forward.1} parent=47 // pred_check_branch
        %2773 = sbr.rel (%p2771) target = $region56
      $region55: #{nafa_forward.1} parent=47 // pred_region
        %s2774 = smul.u32 8, %s22
        %p2775 = scmp.lt.s32.totalorder %s2774, 15
        %s2776 = scalar_select %p2775, %s2774, 15
        %s2777 = smul.addr %s2776, 2
        %s2778 = smul.addr %s2777, 8
        %s2779 = scalar_lea.vmem %s6, %s2778
      $region56: #{nafa_forward.1} parent=47 // pred_fallthru
        _
    $region48: #{nafa_forward.1} parent=5 // pred_fallthru
      _
  $region6: #{nafa_forward.1} parent=0 // loop_footer
    %s20 = sadd.s32 1, %s16
  $region7: #{nafa_forward.1} parent=0 // loop_footer_branch
    %15 = sbr.rel target = $region3
  $region8: #{nafa_forward.1} parent=0 // loop_exit
    _

</llo_original>
